<compile_context>
chip_gen: v6e
topology: v6e:2x2x1
jax: 0.10.0
libtpu: 0.0.40
codegen_flags: <defaults>
</compile_context>

<pallas_src>
import jax
import jax.numpy as jnp
from jax.experimental import pallas as pl
from jax.experimental.pallas import tpu as pltpu
import numpy as np

BN_EPS = 1e-5
NUM_LAYERS = 4


def encoder_kernel(x_ref, w1_ref, w2_ref, w3_ref, w4_ref, bn_ref, o_ref):
    # x_ref:  (N, C, S)   input activations, S = H*W (lane-dense last dim)
    # wX_ref: (F, C_in)   1x1-conv weights (conv bias omitted: cancels in BN)
    # bn_ref: (8, F, 1)   rows [g1, b1, g2, b2, g3, b3, g4, b4]
    # o_ref:  (N, F, S)
    n, _, s = x_ref.shape
    inv_cnt = 1.0 / float(n * s)

    h = x_ref[...].astype(jnp.float32)                       # (N, C, S)
    w_refs = (w1_ref, w2_ref, w3_ref, w4_ref)

    for layer in range(NUM_LAYERS):
        wt = w_refs[layer][...]                              # (F, C_in)
        f, c_in = wt.shape

        # 1x1 conv == per-pixel channel matmul; batched over N on the MXU.
        wt_b = jnp.broadcast_to(wt[None, :, :], (n, f, c_in))
        y = jax.lax.dot_general(
            wt_b, h,
            dimension_numbers=(((2,), (1,)), ((0,), (0,))),
            preferred_element_type=jnp.float32)              # (N, F, S)

        # One-pass batch statistics per channel (reduce over N and S).
        ysum = jnp.sum(jnp.sum(y, axis=0), axis=-1, keepdims=True)        # (F, 1)
        y2sum = jnp.sum(jnp.sum(y * y, axis=0), axis=-1, keepdims=True)   # (F, 1)
        mean = ysum * inv_cnt                                             # (F, 1)
        var = y2sum * inv_cnt - mean * mean                               # (F, 1)

        # Fold BN normalize + affine into a single per-channel scale/shift.
        gamma = bn_ref[2 * layer]                            # (F, 1)
        beta = bn_ref[2 * layer + 1]                         # (F, 1)
        scale = gamma * jax.lax.rsqrt(var + BN_EPS)          # (F, 1)
        shift = beta - mean * scale                          # (F, 1)

        # y*scale + shift, then ReLU — one mul, one add, one max per element.
        h = jnp.maximum(y * scale + shift, 0.0)              # (N, F, S)

    o_ref[...] = h.astype(o_ref.dtype)


def cnn_encoder_pallas(x_nchw, params):
    N, C, H, W = x_nchw.shape
    F = params["conv1_w"].shape[0]
    S = H * W

    # Free reshape (stays NCHW-major): (N, C, H, W) -> (N, C, H*W).
    x3d = x_nchw.reshape(N, C, S)

    # Conv weights (F, C_in, 1, 1) -> (F, C_in); conv biases intentionally
    # dropped (they cancel under the BN batch-mean subtraction).
    wts = [params[f"conv{l}_w"][:, :, 0, 0].astype(jnp.float32)
           for l in range(1, NUM_LAYERS + 1)]

    # BN affine params packed into one slab (single DMA):
    # rows [g1, b1, g2, b2, g3, b3, g4, b4], per-channel values on sublanes.
    bn_rows = []
    for l in range(1, NUM_LAYERS + 1):
        bn_rows.append(params[f"bn{l}_g"])
        bn_rows.append(params[f"bn{l}_b"])
    bn = jnp.stack(bn_rows, axis=0)[:, :, None].astype(jnp.float32)   # (8, F, 1)

    # VMEM budget: input + output + a few live activations + params, clamped
    # with headroom for v7x's 64 MiB physical VMEM.
    act_bytes = N * max(C, F) * S * 4
    param_bytes = sum(int(np.prod(w.shape)) * 4 for w in wts) + int(bn.size) * 4
    vmem_bytes = int(min(6 * act_bytes + param_bytes + (2 << 20),
                         48 * 1024 * 1024))

    vmem = pl.BlockSpec(memory_space=pltpu.MemorySpace.VMEM)
    out3d = pl.pallas_call(
        encoder_kernel,
        out_shape=jax.ShapeDtypeStruct((N, F, S), jnp.float32),
        in_specs=[vmem] * (1 + NUM_LAYERS + 1),
        out_specs=vmem,
        compiler_params=pltpu.CompilerParams(vmem_limit_bytes=vmem_bytes),
    )(x3d, *wts, bn)

    # Free reshape back to NCHW: (N, F, H*W) -> (N, F, H, W).
    return out3d.reshape(N, F, H, W)


def cnn_encoder_ref(x_nchw, params):
    """Pure-JAX reference mirroring the PyTorch forward (BN training mode,
    biased variance), INCLUDING the conv bias (which cancels in BN)."""
    h = x_nchw.astype(jnp.float32)
    for l in range(1, NUM_LAYERS + 1):
        w = params[f"conv{l}_w"][:, :, 0, 0]                     # (F, C_in)
        b = params[f"conv{l}_b"]                                 # (F,)
        y = jnp.einsum("fc,nchw->nfhw", w, h) + b[None, :, None, None]
        mean = jnp.mean(y, axis=(0, 2, 3), keepdims=True)
        var = jnp.mean(jnp.square(y - mean), axis=(0, 2, 3), keepdims=True)
        yhat = (y - mean) / jnp.sqrt(var + BN_EPS)
        g = params[f"bn{l}_g"][None, :, None, None]
        be = params[f"bn{l}_b"][None, :, None, None]
        h = jnp.maximum(yhat * g + be, 0.0)
    return h


def init_params(key, input_channels, feature_dim):
    """Deterministic synthetic init mirroring the module's parameter shapes.
    (BN gamma/beta randomized — rather than the default 1/0 — to exercise the
    fused affine path.)"""
    params = {}
    c_in = input_channels
    for l in range(1, NUM_LAYERS + 1):
        key, kw, kb, kg, kbe = jax.random.split(key, 5)
        bound = 1.0 / np.sqrt(c_in)          # kernel_size = 1
        params[f"conv{l}_w"] = jax.random.uniform(
            kw, (feature_dim, c_in, 1, 1), jnp.float32, -bound, bound)
        params[f"conv{l}_b"] = jax.random.uniform(
            kb, (feature_dim,), jnp.float32, -bound, bound)
        params[f"bn{l}_g"] = jax.random.uniform(
            kg, (feature_dim,), jnp.float32, 0.5, 1.5)
        params[f"bn{l}_b"] = 0.1 * jax.random.normal(
            kbe, (feature_dim,), jnp.float32)
        c_in = feature_dim
    return params


if __name__ == "__main__":
    # Small shapes consistent with the module (NCHW input to 1x1 conv stack).
    N, C, H, W = 2, 4, 16, 16
    FEATURE_DIM = 32

    key = jax.random.PRNGKey(0)
    key, kx = jax.random.split(key)
    x = jax.random.normal(kx, (N, C, H, W), jnp.float32)
    params = init_params(key, input_channels=C, feature_dim=FEATURE_DIM)

    out = cnn_encoder_pallas(x, params)
    out = jax.block_until_ready(out)

    ref = jax.block_until_ready(cnn_encoder_ref(x, params))
    np.testing.assert_allclose(np.asarray(out), np.asarray(ref),
                               rtol=1e-4, atol=1e-4)
    assert out.shape == (N, FEATURE_DIM, H, W)
    print("KERNEL_OK")
</pallas_src>

<mosaic_0001>
module attributes {stable_mosaic.version = 11 : i64} {
  func.func @encoder_kernel(%arg0: memref<2x4x256xf32, #tpu.memory_space<vmem>>, %arg1: memref<32x4xf32, #tpu.memory_space<vmem>>, %arg2: memref<32x32xf32, #tpu.memory_space<vmem>>, %arg3: memref<32x32xf32, #tpu.memory_space<vmem>>, %arg4: memref<32x32xf32, #tpu.memory_space<vmem>>, %arg5: memref<8x32x1xf32, #tpu.memory_space<vmem>>, %arg6: memref<2x32x256xf32, #tpu.memory_space<vmem>>) attributes {dimension_semantics = [], scalar_prefetch = 0 : i64, scratch_operands = 0 : i64, tpu.core_type = #tpu.core_type<tc>} {
    %c0 = arith.constant 0 : index
    %c0_0 = arith.constant 0 : index
    %c0_1 = arith.constant 0 : index
    %0 = vector.load %arg0[%c0, %c0_0, %c0_1] : memref<2x4x256xf32, #tpu.memory_space<vmem>>, vector<2x4x256xf32>
    %c0_2 = arith.constant 0 : index
    %c0_3 = arith.constant 0 : index
    %1 = vector.load %arg1[%c0_2, %c0_3] : memref<32x4xf32, #tpu.memory_space<vmem>>, vector<32x4xf32>
    %2 = vector.shape_cast %1 : vector<32x4xf32> to vector<1x32x4xf32>
    %3 = vector.shape_cast %2 : vector<1x32x4xf32> to vector<1x32x4xf32>
    %4 = vector.broadcast %3 : vector<1x32x4xf32> to vector<2x32x4xf32>
    %cst = arith.constant dense<0.000000e+00> : vector<2x32x256xf32>
    %5 = tpu.matmul %4, %0, %cst {dimension_numbers = #tpu.dot_dimension_numbers<[2], [1], [1], [2], [0, 0, 0, 1, 1, 2], [0], [0]>} : vector<2x32x4xf32>, vector<2x4x256xf32>, vector<2x32x256xf32> -> vector<2x32x256xf32>
    %cst_4 = arith.constant dense<0.000000e+00> : vector<32x256xf32>
    %6 = vector.multi_reduction <add>, %5, %cst_4 [0] : vector<2x32x256xf32> to vector<32x256xf32>
    %cst_5 = arith.constant dense<0.000000e+00> : vector<32xf32>
    %7 = vector.multi_reduction <add>, %6, %cst_5 [1] : vector<32x256xf32> to vector<32xf32>
    %8 = vector.shape_cast %7 : vector<32xf32> to vector<32x1xf32>
    %9 = arith.mulf %5, %5 : vector<2x32x256xf32>
    %cst_6 = arith.constant dense<0.000000e+00> : vector<32x256xf32>
    %10 = vector.multi_reduction <add>, %9, %cst_6 [0] : vector<2x32x256xf32> to vector<32x256xf32>
    %cst_7 = arith.constant dense<0.000000e+00> : vector<32xf32>
    %11 = vector.multi_reduction <add>, %10, %cst_7 [1] : vector<32x256xf32> to vector<32xf32>
    %12 = vector.shape_cast %11 : vector<32xf32> to vector<32x1xf32>
    %cst_8 = arith.constant 0.001953125 : f32
    %13 = vector.broadcast %cst_8 : f32 to vector<32x1xf32>
    %14 = arith.mulf %8, %13 : vector<32x1xf32>
    %cst_9 = arith.constant 0.001953125 : f32
    %15 = vector.broadcast %cst_9 : f32 to vector<32x1xf32>
    %16 = arith.mulf %12, %15 : vector<32x1xf32>
    %17 = arith.mulf %14, %14 : vector<32x1xf32>
    %18 = arith.subf %16, %17 : vector<32x1xf32>
    %c0_10 = arith.constant 0 : index
    %c0_11 = arith.constant 0 : index
    %c0_12 = arith.constant 0 : index
    %19 = vector.load %arg5[%c0_10, %c0_11, %c0_12] : memref<8x32x1xf32, #tpu.memory_space<vmem>>, vector<1x32x1xf32>
    %20 = vector.shape_cast %19 : vector<1x32x1xf32> to vector<32x1xf32>
    %c1 = arith.constant 1 : index
    %c0_13 = arith.constant 0 : index
    %c0_14 = arith.constant 0 : index
    %21 = vector.load %arg5[%c1, %c0_13, %c0_14] : memref<8x32x1xf32, #tpu.memory_space<vmem>>, vector<1x32x1xf32>
    %22 = vector.shape_cast %21 : vector<1x32x1xf32> to vector<32x1xf32>
    %cst_15 = arith.constant 9.99999974E-6 : f32
    %23 = vector.broadcast %cst_15 : f32 to vector<32x1xf32>
    %24 = arith.addf %18, %23 : vector<32x1xf32>
    %25 = math.rsqrt %24 : vector<32x1xf32>
    %26 = arith.mulf %20, %25 : vector<32x1xf32>
    %27 = arith.mulf %14, %26 : vector<32x1xf32>
    %28 = arith.subf %22, %27 : vector<32x1xf32>
    %29 = vector.shape_cast %26 : vector<32x1xf32> to vector<1x32x1xf32>
    %30 = vector.broadcast %29 : vector<1x32x1xf32> to vector<2x32x256xf32>
    %31 = arith.mulf %5, %30 : vector<2x32x256xf32>
    %32 = vector.shape_cast %28 : vector<32x1xf32> to vector<1x32x1xf32>
    %33 = vector.broadcast %32 : vector<1x32x1xf32> to vector<2x32x256xf32>
    %34 = arith.addf %31, %33 : vector<2x32x256xf32>
    %cst_16 = arith.constant 0.000000e+00 : f32
    %35 = vector.broadcast %cst_16 : f32 to vector<2x32x256xf32>
    %36 = arith.maximumf %34, %35 : vector<2x32x256xf32>
    %c0_17 = arith.constant 0 : index
    %c0_18 = arith.constant 0 : index
    %37 = vector.load %arg2[%c0_17, %c0_18] : memref<32x32xf32, #tpu.memory_space<vmem>>, vector<32x32xf32>
    %38 = vector.shape_cast %37 : vector<32x32xf32> to vector<1x32x32xf32>
    %39 = vector.shape_cast %38 : vector<1x32x32xf32> to vector<1x32x32xf32>
    %40 = vector.broadcast %39 : vector<1x32x32xf32> to vector<2x32x32xf32>
    %cst_19 = arith.constant dense<0.000000e+00> : vector<2x32x256xf32>
    %41 = tpu.matmul %40, %36, %cst_19 {dimension_numbers = #tpu.dot_dimension_numbers<[2], [1], [1], [2], [0, 0, 0, 1, 1, 2], [0], [0]>} : vector<2x32x32xf32>, vector<2x32x256xf32>, vector<2x32x256xf32> -> vector<2x32x256xf32>
    %cst_20 = arith.constant dense<0.000000e+00> : vector<32x256xf32>
    %42 = vector.multi_reduction <add>, %41, %cst_20 [0] : vector<2x32x256xf32> to vector<32x256xf32>
    %cst_21 = arith.constant dense<0.000000e+00> : vector<32xf32>
    %43 = vector.multi_reduction <add>, %42, %cst_21 [1] : vector<32x256xf32> to vector<32xf32>
    %44 = vector.shape_cast %43 : vector<32xf32> to vector<32x1xf32>
    %45 = arith.mulf %41, %41 : vector<2x32x256xf32>
    %cst_22 = arith.constant dense<0.000000e+00> : vector<32x256xf32>
    %46 = vector.multi_reduction <add>, %45, %cst_22 [0] : vector<2x32x256xf32> to vector<32x256xf32>
    %cst_23 = arith.constant dense<0.000000e+00> : vector<32xf32>
    %47 = vector.multi_reduction <add>, %46, %cst_23 [1] : vector<32x256xf32> to vector<32xf32>
    %48 = vector.shape_cast %47 : vector<32xf32> to vector<32x1xf32>
    %cst_24 = arith.constant 0.001953125 : f32
    %49 = vector.broadcast %cst_24 : f32 to vector<32x1xf32>
    %50 = arith.mulf %44, %49 : vector<32x1xf32>
    %cst_25 = arith.constant 0.001953125 : f32
    %51 = vector.broadcast %cst_25 : f32 to vector<32x1xf32>
    %52 = arith.mulf %48, %51 : vector<32x1xf32>
    %53 = arith.mulf %50, %50 : vector<32x1xf32>
    %54 = arith.subf %52, %53 : vector<32x1xf32>
    %c2 = arith.constant 2 : index
    %c0_26 = arith.constant 0 : index
    %c0_27 = arith.constant 0 : index
    %55 = vector.load %arg5[%c2, %c0_26, %c0_27] : memref<8x32x1xf32, #tpu.memory_space<vmem>>, vector<1x32x1xf32>
    %56 = vector.shape_cast %55 : vector<1x32x1xf32> to vector<32x1xf32>
    %c3 = arith.constant 3 : index
    %c0_28 = arith.constant 0 : index
    %c0_29 = arith.constant 0 : index
    %57 = vector.load %arg5[%c3, %c0_28, %c0_29] : memref<8x32x1xf32, #tpu.memory_space<vmem>>, vector<1x32x1xf32>
    %58 = vector.shape_cast %57 : vector<1x32x1xf32> to vector<32x1xf32>
    %cst_30 = arith.constant 9.99999974E-6 : f32
    %59 = vector.broadcast %cst_30 : f32 to vector<32x1xf32>
    %60 = arith.addf %54, %59 : vector<32x1xf32>
    %61 = math.rsqrt %60 : vector<32x1xf32>
    %62 = arith.mulf %56, %61 : vector<32x1xf32>
    %63 = arith.mulf %50, %62 : vector<32x1xf32>
    %64 = arith.subf %58, %63 : vector<32x1xf32>
    %65 = vector.shape_cast %62 : vector<32x1xf32> to vector<1x32x1xf32>
    %66 = vector.broadcast %65 : vector<1x32x1xf32> to vector<2x32x256xf32>
    %67 = arith.mulf %41, %66 : vector<2x32x256xf32>
    %68 = vector.shape_cast %64 : vector<32x1xf32> to vector<1x32x1xf32>
    %69 = vector.broadcast %68 : vector<1x32x1xf32> to vector<2x32x256xf32>
    %70 = arith.addf %67, %69 : vector<2x32x256xf32>
    %cst_31 = arith.constant 0.000000e+00 : f32
    %71 = vector.broadcast %cst_31 : f32 to vector<2x32x256xf32>
    %72 = arith.maximumf %70, %71 : vector<2x32x256xf32>
    %c0_32 = arith.constant 0 : index
    %c0_33 = arith.constant 0 : index
    %73 = vector.load %arg3[%c0_32, %c0_33] : memref<32x32xf32, #tpu.memory_space<vmem>>, vector<32x32xf32>
    %74 = vector.shape_cast %73 : vector<32x32xf32> to vector<1x32x32xf32>
    %75 = vector.shape_cast %74 : vector<1x32x32xf32> to vector<1x32x32xf32>
    %76 = vector.broadcast %75 : vector<1x32x32xf32> to vector<2x32x32xf32>
    %cst_34 = arith.constant dense<0.000000e+00> : vector<2x32x256xf32>
    %77 = tpu.matmul %76, %72, %cst_34 {dimension_numbers = #tpu.dot_dimension_numbers<[2], [1], [1], [2], [0, 0, 0, 1, 1, 2], [0], [0]>} : vector<2x32x32xf32>, vector<2x32x256xf32>, vector<2x32x256xf32> -> vector<2x32x256xf32>
    %cst_35 = arith.constant dense<0.000000e+00> : vector<32x256xf32>
    %78 = vector.multi_reduction <add>, %77, %cst_35 [0] : vector<2x32x256xf32> to vector<32x256xf32>
    %cst_36 = arith.constant dense<0.000000e+00> : vector<32xf32>
    %79 = vector.multi_reduction <add>, %78, %cst_36 [1] : vector<32x256xf32> to vector<32xf32>
    %80 = vector.shape_cast %79 : vector<32xf32> to vector<32x1xf32>
    %81 = arith.mulf %77, %77 : vector<2x32x256xf32>
    %cst_37 = arith.constant dense<0.000000e+00> : vector<32x256xf32>
    %82 = vector.multi_reduction <add>, %81, %cst_37 [0] : vector<2x32x256xf32> to vector<32x256xf32>
    %cst_38 = arith.constant dense<0.000000e+00> : vector<32xf32>
    %83 = vector.multi_reduction <add>, %82, %cst_38 [1] : vector<32x256xf32> to vector<32xf32>
    %84 = vector.shape_cast %83 : vector<32xf32> to vector<32x1xf32>
    %cst_39 = arith.constant 0.001953125 : f32
    %85 = vector.broadcast %cst_39 : f32 to vector<32x1xf32>
    %86 = arith.mulf %80, %85 : vector<32x1xf32>
    %cst_40 = arith.constant 0.001953125 : f32
    %87 = vector.broadcast %cst_40 : f32 to vector<32x1xf32>
    %88 = arith.mulf %84, %87 : vector<32x1xf32>
    %89 = arith.mulf %86, %86 : vector<32x1xf32>
    %90 = arith.subf %88, %89 : vector<32x1xf32>
    %c4 = arith.constant 4 : index
    %c0_41 = arith.constant 0 : index
    %c0_42 = arith.constant 0 : index
    %91 = vector.load %arg5[%c4, %c0_41, %c0_42] : memref<8x32x1xf32, #tpu.memory_space<vmem>>, vector<1x32x1xf32>
    %92 = vector.shape_cast %91 : vector<1x32x1xf32> to vector<32x1xf32>
    %c5 = arith.constant 5 : index
    %c0_43 = arith.constant 0 : index
    %c0_44 = arith.constant 0 : index
    %93 = vector.load %arg5[%c5, %c0_43, %c0_44] : memref<8x32x1xf32, #tpu.memory_space<vmem>>, vector<1x32x1xf32>
    %94 = vector.shape_cast %93 : vector<1x32x1xf32> to vector<32x1xf32>
    %cst_45 = arith.constant 9.99999974E-6 : f32
    %95 = vector.broadcast %cst_45 : f32 to vector<32x1xf32>
    %96 = arith.addf %90, %95 : vector<32x1xf32>
    %97 = math.rsqrt %96 : vector<32x1xf32>
    %98 = arith.mulf %92, %97 : vector<32x1xf32>
    %99 = arith.mulf %86, %98 : vector<32x1xf32>
    %100 = arith.subf %94, %99 : vector<32x1xf32>
    %101 = vector.shape_cast %98 : vector<32x1xf32> to vector<1x32x1xf32>
    %102 = vector.broadcast %101 : vector<1x32x1xf32> to vector<2x32x256xf32>
    %103 = arith.mulf %77, %102 : vector<2x32x256xf32>
    %104 = vector.shape_cast %100 : vector<32x1xf32> to vector<1x32x1xf32>
    %105 = vector.broadcast %104 : vector<1x32x1xf32> to vector<2x32x256xf32>
    %106 = arith.addf %103, %105 : vector<2x32x256xf32>
    %cst_46 = arith.constant 0.000000e+00 : f32
    %107 = vector.broadcast %cst_46 : f32 to vector<2x32x256xf32>
    %108 = arith.maximumf %106, %107 : vector<2x32x256xf32>
    %c0_47 = arith.constant 0 : index
    %c0_48 = arith.constant 0 : index
    %109 = vector.load %arg4[%c0_47, %c0_48] : memref<32x32xf32, #tpu.memory_space<vmem>>, vector<32x32xf32>
    %110 = vector.shape_cast %109 : vector<32x32xf32> to vector<1x32x32xf32>
    %111 = vector.shape_cast %110 : vector<1x32x32xf32> to vector<1x32x32xf32>
    %112 = vector.broadcast %111 : vector<1x32x32xf32> to vector<2x32x32xf32>
    %cst_49 = arith.constant dense<0.000000e+00> : vector<2x32x256xf32>
    %113 = tpu.matmul %112, %108, %cst_49 {dimension_numbers = #tpu.dot_dimension_numbers<[2], [1], [1], [2], [0, 0, 0, 1, 1, 2], [0], [0]>} : vector<2x32x32xf32>, vector<2x32x256xf32>, vector<2x32x256xf32> -> vector<2x32x256xf32>
    %cst_50 = arith.constant dense<0.000000e+00> : vector<32x256xf32>
    %114 = vector.multi_reduction <add>, %113, %cst_50 [0] : vector<2x32x256xf32> to vector<32x256xf32>
    %cst_51 = arith.constant dense<0.000000e+00> : vector<32xf32>
    %115 = vector.multi_reduction <add>, %114, %cst_51 [1] : vector<32x256xf32> to vector<32xf32>
    %116 = vector.shape_cast %115 : vector<32xf32> to vector<32x1xf32>
    %117 = arith.mulf %113, %113 : vector<2x32x256xf32>
    %cst_52 = arith.constant dense<0.000000e+00> : vector<32x256xf32>
    %118 = vector.multi_reduction <add>, %117, %cst_52 [0] : vector<2x32x256xf32> to vector<32x256xf32>
    %cst_53 = arith.constant dense<0.000000e+00> : vector<32xf32>
    %119 = vector.multi_reduction <add>, %118, %cst_53 [1] : vector<32x256xf32> to vector<32xf32>
    %120 = vector.shape_cast %119 : vector<32xf32> to vector<32x1xf32>
    %cst_54 = arith.constant 0.001953125 : f32
    %121 = vector.broadcast %cst_54 : f32 to vector<32x1xf32>
    %122 = arith.mulf %116, %121 : vector<32x1xf32>
    %cst_55 = arith.constant 0.001953125 : f32
    %123 = vector.broadcast %cst_55 : f32 to vector<32x1xf32>
    %124 = arith.mulf %120, %123 : vector<32x1xf32>
    %125 = arith.mulf %122, %122 : vector<32x1xf32>
    %126 = arith.subf %124, %125 : vector<32x1xf32>
    %c6 = arith.constant 6 : index
    %c0_56 = arith.constant 0 : index
    %c0_57 = arith.constant 0 : index
    %127 = vector.load %arg5[%c6, %c0_56, %c0_57] : memref<8x32x1xf32, #tpu.memory_space<vmem>>, vector<1x32x1xf32>
    %128 = vector.shape_cast %127 : vector<1x32x1xf32> to vector<32x1xf32>
    %c7 = arith.constant 7 : index
    %c0_58 = arith.constant 0 : index
    %c0_59 = arith.constant 0 : index
    %129 = vector.load %arg5[%c7, %c0_58, %c0_59] : memref<8x32x1xf32, #tpu.memory_space<vmem>>, vector<1x32x1xf32>
    %130 = vector.shape_cast %129 : vector<1x32x1xf32> to vector<32x1xf32>
    %cst_60 = arith.constant 9.99999974E-6 : f32
    %131 = vector.broadcast %cst_60 : f32 to vector<32x1xf32>
    %132 = arith.addf %126, %131 : vector<32x1xf32>
    %133 = math.rsqrt %132 : vector<32x1xf32>
    %134 = arith.mulf %128, %133 : vector<32x1xf32>
    %135 = arith.mulf %122, %134 : vector<32x1xf32>
    %136 = arith.subf %130, %135 : vector<32x1xf32>
    %137 = vector.shape_cast %134 : vector<32x1xf32> to vector<1x32x1xf32>
    %138 = vector.broadcast %137 : vector<1x32x1xf32> to vector<2x32x256xf32>
    %139 = arith.mulf %113, %138 : vector<2x32x256xf32>
    %140 = vector.shape_cast %136 : vector<32x1xf32> to vector<1x32x1xf32>
    %141 = vector.broadcast %140 : vector<1x32x1xf32> to vector<2x32x256xf32>
    %142 = arith.addf %139, %141 : vector<2x32x256xf32>
    %cst_61 = arith.constant 0.000000e+00 : f32
    %143 = vector.broadcast %cst_61 : f32 to vector<2x32x256xf32>
    %144 = arith.maximumf %142, %143 : vector<2x32x256xf32>
    %c0_62 = arith.constant 0 : index
    %c0_63 = arith.constant 0 : index
    %c0_64 = arith.constant 0 : index
    %145 = vector.load %arg6[%c0_62, %c0_63, %c0_64] : memref<2x32x256xf32, #tpu.memory_space<vmem>>, vector<2x32x256xf32>
    tpu.vector_store %arg6[%c0_62, %c0_63, %c0_64], %144 {strides = array<i32>} : memref<2x32x256xf32, #tpu.memory_space<vmem>>, vector<2x32x256xf32>,
    return
  }
}

</mosaic_0001>

<llo_original>
// kernel: tpu_custom_call.1
$region0: #{tpu_custom_call.1}
  #allocation0 [shape = 'u32[]', space=smem, size = 0x4, offset = 0x4, fixed_abs, tag = 'smem constant byte address 0x4 - core index']
  #allocation1 [shape = 'u32[144,128]{1,0:T(1,128)}', space=vmem, size = 0x12000, scoped, tag = 'internal scratch']
  %s0 = inlined_call_operand.vmem [shape: f32[2,4,256], index: 0, kind: input, shape index: {}]
  %s1 = inlined_call_operand.vmem [shape: f32[32,4], index: 1, kind: input, shape index: {}]
  %s2 = inlined_call_operand.vmem [shape: f32[32,32], index: 2, kind: input, shape index: {}]
  %s3 = inlined_call_operand.vmem [shape: f32[32,32], index: 3, kind: input, shape index: {}]
  %s4 = inlined_call_operand.vmem [shape: f32[32,32], index: 4, kind: input, shape index: {}]
  %s5 = inlined_call_operand.vmem [shape: f32[8,32,1], index: 5, kind: input, shape index: {}]
  %s6 = inlined_call_operand.hbm [shape: f32[2,32,256], index: 6, kind: output, shape index: {}]
  %s7 = sld [smem:[#allocation0]]
  $region34: #{tpu_custom_call.1} parent=0
    _
  %s9 = ssub.s32 1, %s7
  %s10 = scalar_select 0, %s9, %s7
  $region1: #{tpu_custom_call.1} parent=0
    #allocation2 [shape = 'u8[65536]{0}', space=vmem, size = 0x10000, scoped, tag = 'output window, operand 0, single buffered']
    #allocation3 [shape = 's32[1]{0}', space=sflag, size = 0x4, scoped, tag = 'scoped memory for tpu_custom_call.1']
    %11 = vsyncpa [#allocation3], 0
    // Predicated region
    $region2: #{tpu_custom_call.1} parent=1 // pred_check
      _
    $region3: #{tpu_custom_call.1} parent=1 // pred_check_branch
      %13 = sbr.rel (0) target = $region5
    $region4: #{tpu_custom_call.1} parent=1 // pred_region
      _
    $region5: #{tpu_custom_call.1} parent=1 // pred_fallthru
      _
    // Predicated region
    $region6: #{tpu_custom_call.1} parent=1 // pred_check
      _
    $region7: #{tpu_custom_call.1} parent=1 // pred_check_branch
      %15 = sbr.rel (0) target = $region9
    $region8: #{tpu_custom_call.1} parent=1 // pred_region
      _
    $region9: #{tpu_custom_call.1} parent=1 // pred_fallthru
      _
    // Predicated region
    $region10: #{tpu_custom_call.1} parent=1 // pred_check
      _
    $region11: #{tpu_custom_call.1} parent=1 // pred_check_branch
      %17 = sbr.rel (0) target = $region13
    $region12: #{tpu_custom_call.1} parent=1 // pred_region
      _
    $region13: #{tpu_custom_call.1} parent=1 // pred_fallthru
      _
    // Predicated region
    $region14: #{tpu_custom_call.1} parent=1 // pred_check
      _
    $region15: #{tpu_custom_call.1} parent=1 // pred_check_branch
      %19 = sbr.rel (0) target = $region17
    $region16: #{tpu_custom_call.1} parent=1 // pred_region
      _
    $region17: #{tpu_custom_call.1} parent=1 // pred_fallthru
      _
    // Predicated region
    $region18: #{tpu_custom_call.1} parent=1 // pred_check
      _
    $region19: #{tpu_custom_call.1} parent=1 // pred_check_branch
      %21 = sbr.rel (0) target = $region21
    $region20: #{tpu_custom_call.1} parent=1 // pred_region
      _
    $region21: #{tpu_custom_call.1} parent=1 // pred_fallthru
      _
    // Predicated region
    $region22: #{tpu_custom_call.1} parent=1 // pred_check
      _
    $region23: #{tpu_custom_call.1} parent=1 // pred_check_branch
      %23 = sbr.rel (0) target = $region25
    $region24: #{tpu_custom_call.1} parent=1 // pred_region
      _
    $region25: #{tpu_custom_call.1} parent=1 // pred_fallthru
      _
    %v24 = vld [vmem:[%s0] sm:$0xff]
    %v25 = vld [vmem:[%s0 + $0x8] sm:$0xff]
    %v26 = vld [vmem:[%s1] sm:$0xff]
    %v27 = vld [vmem:[%s1 + $0x8] sm:$0xff]
    %v28 = vld [vmem:[%s1 + $0x10] sm:$0xff]
    %v29 = vld [vmem:[%s1 + $0x18] sm:$0xff]
    %v31 = vcombine.high %v24, %v24
    %vm32 = vcmask 31744
    %v34 = vsel %vm32, %v26, 0
    %v37 = vsel %vm32, %v27, 0
    %v40 = vsel %vm32, %v28, 0
    %v43 = vsel %vm32, %v29, 0
    %vm45 = vcmask 1043456
    %v46 = vsel %vm45, %v24, 0
    %v48 = vsel %vm45, %v31, 0
    %50 = vmatprep.subr.mxu0 0.0
    %51 = vmatpush1.msra.mxu0 0.0
    %52 = vmatprep.subr.mxu0 0.0
    %53 = vmatpush1.msra.mxu0 0.0
    %54 = vmatprep.subr.mxu0 0.0
    %55 = vmatpush1.msra.mxu0 0.0
    %56 = vmatprep.subr.mxu0 0.0
    %57 = vmatpush1.msra.mxu0 0.0
    %58 = vmatprep.subr.mxu0 0.0
    %59 = vmatpush1.msra.mxu0 0.0
    %60 = vmatprep.subr.mxu0 0.0
    %61 = vmatpush1.msra.mxu0 0.0
    %62 = vmatprep.subr.mxu0 0.0
    %63 = vmatpush1.msra.mxu0 0.0
    %64 = vmatprep.subr.mxu0 0.0
    %65 = vmatpush1.msra.mxu0 0.0
    %66 = vmatprep.subr.mxu0 0.0
    %67 = vmatpush1.msra.mxu0 0.0
    %68 = vmatprep.subr.mxu0 0.0
    %69 = vmatpush1.msra.mxu0 0.0
    %70 = vmatprep.subr.mxu0 0.0
    %71 = vmatpush1.msra.mxu0 0.0
    %72 = vmatprep.subr.mxu0 0.0
    %73 = vmatpush1.msra.mxu0 0.0
    %74 = vmatprep.subr.mxu0 0.0
    %75 = vmatpush1.msra.mxu0 0.0
    %76 = vmatprep.subr.mxu0 0.0
    %77 = vmatpush1.msra.mxu0 0.0
    %78 = vmatprep.subr.mxu0 0.0
    %79 = vmatpush1.msra.mxu0 0.0
    %80 = vmatprep.subr.mxu0 %v48
    %81 = vmatpush1.msra.mxu0 %v46
    %82 = vmatprep.subr.mxu0 0.0
    %83 = vmatpush2.msra.mxu0 0.0
    %84 = vmatprep.subr.mxu0 0.0
    %85 = vmatpush2.msra.mxu0 0.0
    %86 = vmatprep.subr.mxu0 0.0
    %87 = vmatpush2.msra.mxu0 0.0
    %88 = vmatprep.subr.mxu0 0.0
    %89 = vmatpush2.msra.mxu0 0.0
    %90 = vmatprep.subr.mxu0 0.0
    %91 = vmatpush2.msra.mxu0 0.0
    %92 = vmatprep.subr.mxu0 0.0
    %93 = vmatpush2.msra.mxu0 0.0
    %94 = vmatprep.subr.mxu0 0.0
    %95 = vmatpush2.msra.mxu0 0.0
    %96 = vmatprep.subr.mxu0 0.0
    %97 = vmatpush2.msra.mxu0 0.0
    %98 = vmatprep.subr.mxu0 0.0
    %99 = vmatpush2.msra.mxu0 0.0
    %100 = vmatprep.subr.mxu0 0.0
    %101 = vmatpush2.msra.mxu0 0.0
    %102 = vmatprep.subr.mxu0 0.0
    %103 = vmatpush2.msra.mxu0 0.0
    %104 = vmatprep.subr.mxu0 0.0
    %105 = vmatpush2.msra.mxu0 0.0
    %106 = vmatprep.subr.mxu0 0.0
    %107 = vmatpush2.msra.mxu0 0.0
    %108 = vmatprep.subr.mxu0 0.0
    %109 = vmatpush2.msra.mxu0 0.0
    %110 = vmatprep.subr.mxu0 0.0
    %111 = vmatpush2.msra.mxu0 0.0
    %112 = vmatprep.subr.mxu0 0.0
    %113 = vmatpush2.msra.mxu0 0.0
    %114 = vmatprep.mubr.f32.mxu0 0.0
    %115 = vmatmul.mubr.f32.gmra.mxu0 %v34
    %v116 = vpop.f32.mrf.mxu0
    %v117 = vadd.f32 0.0, %v116
    %v118 = vpop.f32.mrf.mxu0
    %v119 = vadd.f32 0.0, %v118
    %120 = vmatprep.mubr.f32.mxu0 0.0
    %121 = vmatmul.mubr.f32.gmra.mxu0 %v37
    %v122 = vpop.f32.mrf.mxu0
    %v123 = vadd.f32 0.0, %v122
    %v124 = vpop.f32.mrf.mxu0
    %v125 = vadd.f32 0.0, %v124
    %126 = vmatprep.mubr.f32.mxu0 0.0
    %127 = vmatmul.mubr.f32.gmra.mxu0 %v40
    %v128 = vpop.f32.mrf.mxu0
    %v129 = vadd.f32 0.0, %v128
    %v130 = vpop.f32.mrf.mxu0
    %v131 = vadd.f32 0.0, %v130
    %132 = vmatprep.mubr.f32.mxu0 0.0
    %133 = vmatmul.mubr.f32.gmra.mxu0 %v43
    %v134 = vpop.f32.mrf.mxu0
    %v135 = vadd.f32 0.0, %v134
    %v136 = vpop.f32.mrf.mxu0
    %v137 = vadd.f32 0.0, %v136
    %138 = vdwg.mxu0
    %v140 = vcombine.high %v25, %v25
    %v141 = vsel %vm45, %v25, 0
    %v143 = vsel %vm45, %v140, 0
    %145 = vmatprep.subr.mxu0 0.0
    %146 = vmatpush1.msra.mxu0 0.0
    %147 = vmatprep.subr.mxu0 0.0
    %148 = vmatpush1.msra.mxu0 0.0
    %149 = vmatprep.subr.mxu0 0.0
    %150 = vmatpush1.msra.mxu0 0.0
    %151 = vmatprep.subr.mxu0 0.0
    %152 = vmatpush1.msra.mxu0 0.0
    %153 = vmatprep.subr.mxu0 0.0
    %154 = vmatpush1.msra.mxu0 0.0
    %155 = vmatprep.subr.mxu0 0.0
    %156 = vmatpush1.msra.mxu0 0.0
    %157 = vmatprep.subr.mxu0 0.0
    %158 = vmatpush1.msra.mxu0 0.0
    %159 = vmatprep.subr.mxu0 0.0
    %160 = vmatpush1.msra.mxu0 0.0
    %161 = vmatprep.subr.mxu0 0.0
    %162 = vmatpush1.msra.mxu0 0.0
    %163 = vmatprep.subr.mxu0 0.0
    %164 = vmatpush1.msra.mxu0 0.0
    %165 = vmatprep.subr.mxu0 0.0
    %166 = vmatpush1.msra.mxu0 0.0
    %167 = vmatprep.subr.mxu0 0.0
    %168 = vmatpush1.msra.mxu0 0.0
    %169 = vmatprep.subr.mxu0 0.0
    %170 = vmatpush1.msra.mxu0 0.0
    %171 = vmatprep.subr.mxu0 0.0
    %172 = vmatpush1.msra.mxu0 0.0
    %173 = vmatprep.subr.mxu0 0.0
    %174 = vmatpush1.msra.mxu0 0.0
    %175 = vmatprep.subr.mxu0 %v143
    %176 = vmatpush1.msra.mxu0 %v141
    %177 = vmatprep.subr.mxu0 0.0
    %178 = vmatpush2.msra.mxu0 0.0
    %179 = vmatprep.subr.mxu0 0.0
    %180 = vmatpush2.msra.mxu0 0.0
    %181 = vmatprep.subr.mxu0 0.0
    %182 = vmatpush2.msra.mxu0 0.0
    %183 = vmatprep.subr.mxu0 0.0
    %184 = vmatpush2.msra.mxu0 0.0
    %185 = vmatprep.subr.mxu0 0.0
    %186 = vmatpush2.msra.mxu0 0.0
    %187 = vmatprep.subr.mxu0 0.0
    %188 = vmatpush2.msra.mxu0 0.0
    %189 = vmatprep.subr.mxu0 0.0
    %190 = vmatpush2.msra.mxu0 0.0
    %191 = vmatprep.subr.mxu0 0.0
    %192 = vmatpush2.msra.mxu0 0.0
    %193 = vmatprep.subr.mxu0 0.0
    %194 = vmatpush2.msra.mxu0 0.0
    %195 = vmatprep.subr.mxu0 0.0
    %196 = vmatpush2.msra.mxu0 0.0
    %197 = vmatprep.subr.mxu0 0.0
    %198 = vmatpush2.msra.mxu0 0.0
    %199 = vmatprep.subr.mxu0 0.0
    %200 = vmatpush2.msra.mxu0 0.0
    %201 = vmatprep.subr.mxu0 0.0
    %202 = vmatpush2.msra.mxu0 0.0
    %203 = vmatprep.subr.mxu0 0.0
    %204 = vmatpush2.msra.mxu0 0.0
    %205 = vmatprep.subr.mxu0 0.0
    %206 = vmatpush2.msra.mxu0 0.0
    %207 = vmatprep.subr.mxu0 0.0
    %208 = vmatpush2.msra.mxu0 0.0
    %209 = vmatprep.mubr.f32.mxu0 0.0
    %210 = vmatmul.mubr.f32.gmra.mxu0 %v34
    %v211 = vpop.f32.mrf.mxu0
    %v212 = vadd.f32 0.0, %v211
    %v213 = vpop.f32.mrf.mxu0
    %v214 = vadd.f32 0.0, %v213
    %215 = vmatprep.mubr.f32.mxu0 0.0
    %216 = vmatmul.mubr.f32.gmra.mxu0 %v37
    %v217 = vpop.f32.mrf.mxu0
    %v218 = vadd.f32 0.0, %v217
    %v219 = vpop.f32.mrf.mxu0
    %v220 = vadd.f32 0.0, %v219
    %221 = vmatprep.mubr.f32.mxu0 0.0
    %222 = vmatmul.mubr.f32.gmra.mxu0 %v40
    %v223 = vpop.f32.mrf.mxu0
    %v224 = vadd.f32 0.0, %v223
    %v225 = vpop.f32.mrf.mxu0
    %v226 = vadd.f32 0.0, %v225
    %227 = vmatprep.mubr.f32.mxu0 0.0
    %228 = vmatmul.mubr.f32.gmra.mxu0 %v43
    %v229 = vpop.f32.mrf.mxu0
    %v230 = vadd.f32 0.0, %v229
    %v231 = vpop.f32.mrf.mxu0
    %v232 = vadd.f32 0.0, %v231
    %233 = vdwg.mxu0
    %v234 = vadd.f32 %v117, %v212
    %v235 = vadd.f32 %v119, %v214
    %v236 = vadd.f32 %v123, %v218
    %v237 = vadd.f32 %v125, %v220
    %v238 = vadd.f32 %v129, %v224
    %v239 = vadd.f32 %v131, %v226
    %v240 = vadd.f32 %v135, %v230
    %v241 = vadd.f32 %v137, %v232
    %v242 = vadd.f32 %v234, %v235
    %243 = vadd.xlane.f32.xlu0 %v242
    %v244 = vpop.xlane.xlu0 %243
    %v245 = vadd.f32 %v236, %v237
    %246 = vadd.xlane.f32.xlu0 %v245
    %v247 = vpop.xlane.xlu0 %246
    %v248 = vadd.f32 %v238, %v239
    %249 = vadd.xlane.f32.xlu0 %v248
    %v250 = vpop.xlane.xlu0 %249
    %v251 = vadd.f32 %v240, %v241
    %252 = vadd.xlane.f32.xlu0 %v251
    %v253 = vpop.xlane.xlu0 %252
    %v254 = vmul.f32 %v117, %v117
    %v255 = vmul.f32 %v119, %v119
    %v256 = vmul.f32 %v123, %v123
    %v257 = vmul.f32 %v125, %v125
    %v258 = vmul.f32 %v129, %v129
    %v259 = vmul.f32 %v131, %v131
    %v260 = vmul.f32 %v135, %v135
    %v261 = vmul.f32 %v137, %v137
    %v262 = vmul.f32 %v212, %v212
    %v263 = vmul.f32 %v214, %v214
    %v264 = vmul.f32 %v218, %v218
    %v265 = vmul.f32 %v220, %v220
    %v266 = vmul.f32 %v224, %v224
    %v267 = vmul.f32 %v226, %v226
    %v268 = vmul.f32 %v230, %v230
    %v269 = vmul.f32 %v232, %v232
    %v270 = vadd.f32 %v254, %v262
    %v271 = vadd.f32 %v255, %v263
    %v272 = vadd.f32 %v256, %v264
    %v273 = vadd.f32 %v257, %v265
    %v274 = vadd.f32 %v258, %v266
    %v275 = vadd.f32 %v259, %v267
    %v276 = vadd.f32 %v260, %v268
    %v277 = vadd.f32 %v261, %v269
    %v278 = vadd.f32 %v270, %v271
    %279 = vadd.xlane.f32.xlu0 %v278
    %v280 = vpop.xlane.xlu0 %279
    %v281 = vadd.f32 %v272, %v273
    %282 = vadd.xlane.f32.xlu0 %v281
    %v283 = vpop.xlane.xlu0 %282
    %v284 = vadd.f32 %v274, %v275
    %285 = vadd.xlane.f32.xlu0 %v284
    %v286 = vpop.xlane.xlu0 %285
    %v287 = vadd.f32 %v276, %v277
    %288 = vadd.xlane.f32.xlu0 %v287
    %v289 = vpop.xlane.xlu0 %288
    %v290 = vmul.f32 %v244, 0.001953125
    %v291 = vmul.f32 %v247, 0.001953125
    %v292 = vmul.f32 %v250, 0.001953125
    %v293 = vmul.f32 %v253, 0.001953125
    %v294 = vmul.f32 %v280, 0.001953125
    %v295 = vmul.f32 %v283, 0.001953125
    %v296 = vmul.f32 %v286, 0.001953125
    %v297 = vmul.f32 %v289, 0.001953125
    %v298 = vmul.f32 %v290, %v290
    %v299 = vmul.f32 %v291, %v291
    %v300 = vmul.f32 %v292, %v292
    %v301 = vmul.f32 %v293, %v293
    %v302 = vsub.f32 %v294, %v298
    %v303 = vsub.f32 %v295, %v299
    %v304 = vsub.f32 %v296, %v300
    %v305 = vsub.f32 %v297, %v301
    %v306 = vld [vmem:[%s5] sm:$0xff]
    %v307 = vld [vmem:[%s5 + $0x8] sm:$0xff]
    %v308 = vld [vmem:[%s5 + $0x10] sm:$0xff]
    %v309 = vld [vmem:[%s5 + $0x18] sm:$0xff]
    %s310 = scalar_lea.vmem %s5, 32
    %v311 = vld [vmem:[%s310] sm:$0xff]
    %v312 = vld [vmem:[%s310 + $0x8] sm:$0xff]
    %v313 = vld [vmem:[%s310 + $0x10] sm:$0xff]
    %v314 = vld [vmem:[%s310 + $0x18] sm:$0xff]
    %v315 = vadd.f32 %v302, 1e-05
    %v316 = vadd.f32 %v303, 1e-05
    %v317 = vadd.f32 %v304, 1e-05
    %v318 = vadd.f32 %v305, 1e-05
    %v319 = vrsqrt.pop %v315
    %v320 = vrsqrt.pop %v316
    %v321 = vrsqrt.pop %v317
    %v322 = vrsqrt.pop %v318
    %v323 = vmul.f32 %v306, %v319
    %v324 = vmul.f32 %v307, %v320
    %v325 = vmul.f32 %v308, %v321
    %v326 = vmul.f32 %v309, %v322
    %v327 = vmul.f32 %v290, %v323
    %v328 = vmul.f32 %v291, %v324
    %v329 = vmul.f32 %v292, %v325
    %v330 = vmul.f32 %v293, %v326
    %v331 = vsub.f32 %v311, %v327
    %v332 = vsub.f32 %v312, %v328
    %v333 = vsub.f32 %v313, %v329
    %v334 = vsub.f32 %v314, %v330
    %336 = vset.pattern.permute.xlu0 0
    %337 = vperm.xlu0 %336, %v323
    %v338 = vpop.permute.xlu0 %337
    %341 = vset.pattern.permute.xlu0 0
    %342 = vperm.xlu0 %341, %v324
    %v343 = vpop.permute.xlu0 %342
    %346 = vset.pattern.permute.xlu0 0
    %347 = vperm.xlu0 %346, %v325
    %v348 = vpop.permute.xlu0 %347
    %351 = vset.pattern.permute.xlu0 0
    %352 = vperm.xlu0 %351, %v326
    %v353 = vpop.permute.xlu0 %352
    %v355 = vmul.f32 %v117, %v338
    %v356 = vmul.f32 %v119, %v338
    %v357 = vmul.f32 %v123, %v343
    %v358 = vmul.f32 %v125, %v343
    %v359 = vmul.f32 %v129, %v348
    %v360 = vmul.f32 %v131, %v348
    %v361 = vmul.f32 %v135, %v353
    %v362 = vmul.f32 %v137, %v353
    %v363 = vmul.f32 %v212, %v338
    %v364 = vmul.f32 %v214, %v338
    %v365 = vmul.f32 %v218, %v343
    %v366 = vmul.f32 %v220, %v343
    %v367 = vmul.f32 %v224, %v348
    %v368 = vmul.f32 %v226, %v348
    %v369 = vmul.f32 %v230, %v353
    %v370 = vmul.f32 %v232, %v353
    %372 = vset.pattern.permute.xlu0 0
    %373 = vperm.xlu0 %372, %v331
    %v374 = vpop.permute.xlu0 %373
    %377 = vset.pattern.permute.xlu0 0
    %378 = vperm.xlu0 %377, %v332
    %v379 = vpop.permute.xlu0 %378
    %382 = vset.pattern.permute.xlu0 0
    %383 = vperm.xlu0 %382, %v333
    %v384 = vpop.permute.xlu0 %383
    %387 = vset.pattern.permute.xlu0 0
    %388 = vperm.xlu0 %387, %v334
    %v389 = vpop.permute.xlu0 %388
    %v391 = vadd.f32 %v355, %v374
    %v392 = vadd.f32 %v356, %v374
    %v393 = vadd.f32 %v357, %v379
    %v394 = vadd.f32 %v358, %v379
    %v395 = vadd.f32 %v359, %v384
    %v396 = vadd.f32 %v360, %v384
    %v397 = vadd.f32 %v361, %v389
    %v398 = vadd.f32 %v362, %v389
    %v399 = vadd.f32 %v363, %v374
    %v400 = vadd.f32 %v364, %v374
    %v401 = vadd.f32 %v365, %v379
    %v402 = vadd.f32 %v366, %v379
    %v403 = vadd.f32 %v367, %v384
    %v404 = vadd.f32 %v368, %v384
    %v405 = vadd.f32 %v369, %v389
    %v406 = vadd.f32 %v370, %v389
    %v407 = vmax.f32 %v391, 0.0
    %v408 = vmax.f32 %v392, 0.0
    %v409 = vmax.f32 %v393, 0.0
    %v410 = vmax.f32 %v394, 0.0
    %v411 = vmax.f32 %v395, 0.0
    %v412 = vmax.f32 %v396, 0.0
    %v413 = vmax.f32 %v397, 0.0
    %v414 = vmax.f32 %v398, 0.0
    %v415 = vmax.f32 %v399, 0.0
    %v416 = vmax.f32 %v400, 0.0
    %v417 = vmax.f32 %v401, 0.0
    %v418 = vmax.f32 %v402, 0.0
    %v419 = vmax.f32 %v403, 0.0
    %v420 = vmax.f32 %v404, 0.0
    %v421 = vmax.f32 %v405, 0.0
    %v422 = vmax.f32 %v406, 0.0
    %v423 = vld [vmem:[%s2] sm:$0xff]
    %v424 = vld [vmem:[%s2 + $0x8] sm:$0xff]
    %v425 = vld [vmem:[%s2 + $0x10] sm:$0xff]
    %v426 = vld [vmem:[%s2 + $0x18] sm:$0xff]
    %vm427 = vcmask 261120
    %v429 = vsel %vm427, %v423, 0
    %v432 = vsel %vm427, %v424, 0
    %v435 = vsel %vm427, %v425, 0
    %v438 = vsel %vm427, %v426, 0
    %440 = vmatprep.subr.mxu0 0.0
    %441 = vmatpush1.msra.mxu0 0.0
    %442 = vmatprep.subr.mxu0 0.0
    %443 = vmatpush1.msra.mxu0 0.0
    %444 = vmatprep.subr.mxu0 0.0
    %445 = vmatpush1.msra.mxu0 0.0
    %446 = vmatprep.subr.mxu0 0.0
    %447 = vmatpush1.msra.mxu0 0.0
    %448 = vmatprep.subr.mxu0 0.0
    %449 = vmatpush1.msra.mxu0 0.0
    %450 = vmatprep.subr.mxu0 0.0
    %451 = vmatpush1.msra.mxu0 0.0
    %452 = vmatprep.subr.mxu0 0.0
    %453 = vmatpush1.msra.mxu0 0.0
    %454 = vmatprep.subr.mxu0 0.0
    %455 = vmatpush1.msra.mxu0 0.0
    %456 = vmatprep.subr.mxu0 0.0
    %457 = vmatpush1.msra.mxu0 0.0
    %458 = vmatprep.subr.mxu0 0.0
    %459 = vmatpush1.msra.mxu0 0.0
    %460 = vmatprep.subr.mxu0 0.0
    %461 = vmatpush1.msra.mxu0 0.0
    %462 = vmatprep.subr.mxu0 0.0
    %463 = vmatpush1.msra.mxu0 0.0
    %464 = vmatprep.subr.mxu0 %v414
    %465 = vmatpush1.msra.mxu0 %v413
    %466 = vmatprep.subr.mxu0 %v412
    %467 = vmatpush1.msra.mxu0 %v411
    %468 = vmatprep.subr.mxu0 %v410
    %469 = vmatpush1.msra.mxu0 %v409
    %470 = vmatprep.subr.mxu0 %v408
    %471 = vmatpush1.msra.mxu0 %v407
    %472 = vmatprep.subr.mxu0 0.0
    %473 = vmatpush2.msra.mxu0 0.0
    %474 = vmatprep.subr.mxu0 0.0
    %475 = vmatpush2.msra.mxu0 0.0
    %476 = vmatprep.subr.mxu0 0.0
    %477 = vmatpush2.msra.mxu0 0.0
    %478 = vmatprep.subr.mxu0 0.0
    %479 = vmatpush2.msra.mxu0 0.0
    %480 = vmatprep.subr.mxu0 0.0
    %481 = vmatpush2.msra.mxu0 0.0
    %482 = vmatprep.subr.mxu0 0.0
    %483 = vmatpush2.msra.mxu0 0.0
    %484 = vmatprep.subr.mxu0 0.0
    %485 = vmatpush2.msra.mxu0 0.0
    %486 = vmatprep.subr.mxu0 0.0
    %487 = vmatpush2.msra.mxu0 0.0
    %488 = vmatprep.subr.mxu0 0.0
    %489 = vmatpush2.msra.mxu0 0.0
    %490 = vmatprep.subr.mxu0 0.0
    %491 = vmatpush2.msra.mxu0 0.0
    %492 = vmatprep.subr.mxu0 0.0
    %493 = vmatpush2.msra.mxu0 0.0
    %494 = vmatprep.subr.mxu0 0.0
    %495 = vmatpush2.msra.mxu0 0.0
    %496 = vmatprep.subr.mxu0 0.0
    %497 = vmatpush2.msra.mxu0 0.0
    %498 = vmatprep.subr.mxu0 0.0
    %499 = vmatpush2.msra.mxu0 0.0
    %500 = vmatprep.subr.mxu0 0.0
    %501 = vmatpush2.msra.mxu0 0.0
    %502 = vmatprep.subr.mxu0 0.0
    %503 = vmatpush2.msra.mxu0 0.0
    %504 = vmatprep.mubr.f32.mxu0 0.0
    %505 = vmatmul.mubr.f32.gmra.mxu0 %v429
    %v506 = vpop.f32.mrf.mxu0
    %v507 = vadd.f32 0.0, %v506
    %v508 = vpop.f32.mrf.mxu0
    %v509 = vadd.f32 0.0, %v508
    %510 = vmatprep.mubr.f32.mxu0 0.0
    %511 = vmatmul.mubr.f32.gmra.mxu0 %v432
    %v512 = vpop.f32.mrf.mxu0
    %v513 = vadd.f32 0.0, %v512
    %v514 = vpop.f32.mrf.mxu0
    %v515 = vadd.f32 0.0, %v514
    %516 = vmatprep.mubr.f32.mxu0 0.0
    %517 = vmatmul.mubr.f32.gmra.mxu0 %v435
    %v518 = vpop.f32.mrf.mxu0
    %v519 = vadd.f32 0.0, %v518
    %v520 = vpop.f32.mrf.mxu0
    %v521 = vadd.f32 0.0, %v520
    %522 = vmatprep.mubr.f32.mxu0 0.0
    %523 = vmatmul.mubr.f32.gmra.mxu0 %v438
    %v524 = vpop.f32.mrf.mxu0
    %v525 = vadd.f32 0.0, %v524
    %v526 = vpop.f32.mrf.mxu0
    %v527 = vadd.f32 0.0, %v526
    %528 = vdwg.mxu0
    %529 = vmatprep.subr.mxu0 0.0
    %530 = vmatpush1.msra.mxu0 0.0
    %531 = vmatprep.subr.mxu0 0.0
    %532 = vmatpush1.msra.mxu0 0.0
    %533 = vmatprep.subr.mxu0 0.0
    %534 = vmatpush1.msra.mxu0 0.0
    %535 = vmatprep.subr.mxu0 0.0
    %536 = vmatpush1.msra.mxu0 0.0
    %537 = vmatprep.subr.mxu0 0.0
    %538 = vmatpush1.msra.mxu0 0.0
    %539 = vmatprep.subr.mxu0 0.0
    %540 = vmatpush1.msra.mxu0 0.0
    %541 = vmatprep.subr.mxu0 0.0
    %542 = vmatpush1.msra.mxu0 0.0
    %543 = vmatprep.subr.mxu0 0.0
    %544 = vmatpush1.msra.mxu0 0.0
    %545 = vmatprep.subr.mxu0 0.0
    %546 = vmatpush1.msra.mxu0 0.0
    %547 = vmatprep.subr.mxu0 0.0
    %548 = vmatpush1.msra.mxu0 0.0
    %549 = vmatprep.subr.mxu0 0.0
    %550 = vmatpush1.msra.mxu0 0.0
    %551 = vmatprep.subr.mxu0 0.0
    %552 = vmatpush1.msra.mxu0 0.0
    %553 = vmatprep.subr.mxu0 %v422
    %554 = vmatpush1.msra.mxu0 %v421
    %555 = vmatprep.subr.mxu0 %v420
    %556 = vmatpush1.msra.mxu0 %v419
    %557 = vmatprep.subr.mxu0 %v418
    %558 = vmatpush1.msra.mxu0 %v417
    %559 = vmatprep.subr.mxu0 %v416
    %560 = vmatpush1.msra.mxu0 %v415
    %561 = vmatprep.subr.mxu0 0.0
    %562 = vmatpush2.msra.mxu0 0.0
    %563 = vmatprep.subr.mxu0 0.0
    %564 = vmatpush2.msra.mxu0 0.0
    %565 = vmatprep.subr.mxu0 0.0
    %566 = vmatpush2.msra.mxu0 0.0
    %567 = vmatprep.subr.mxu0 0.0
    %568 = vmatpush2.msra.mxu0 0.0
    %569 = vmatprep.subr.mxu0 0.0
    %570 = vmatpush2.msra.mxu0 0.0
    %571 = vmatprep.subr.mxu0 0.0
    %572 = vmatpush2.msra.mxu0 0.0
    %573 = vmatprep.subr.mxu0 0.0
    %574 = vmatpush2.msra.mxu0 0.0
    %575 = vmatprep.subr.mxu0 0.0
    %576 = vmatpush2.msra.mxu0 0.0
    %577 = vmatprep.subr.mxu0 0.0
    %578 = vmatpush2.msra.mxu0 0.0
    %579 = vmatprep.subr.mxu0 0.0
    %580 = vmatpush2.msra.mxu0 0.0
    %581 = vmatprep.subr.mxu0 0.0
    %582 = vmatpush2.msra.mxu0 0.0
    %583 = vmatprep.subr.mxu0 0.0
    %584 = vmatpush2.msra.mxu0 0.0
    %585 = vmatprep.subr.mxu0 0.0
    %586 = vmatpush2.msra.mxu0 0.0
    %587 = vmatprep.subr.mxu0 0.0
    %588 = vmatpush2.msra.mxu0 0.0
    %589 = vmatprep.subr.mxu0 0.0
    %590 = vmatpush2.msra.mxu0 0.0
    %591 = vmatprep.subr.mxu0 0.0
    %592 = vmatpush2.msra.mxu0 0.0
    %593 = vmatprep.mubr.f32.mxu0 0.0
    %594 = vmatmul.mubr.f32.gmra.mxu0 %v429
    %v595 = vpop.f32.mrf.mxu0
    %v596 = vadd.f32 0.0, %v595
    %v597 = vpop.f32.mrf.mxu0
    %v598 = vadd.f32 0.0, %v597
    %599 = vmatprep.mubr.f32.mxu0 0.0
    %600 = vmatmul.mubr.f32.gmra.mxu0 %v432
    %v601 = vpop.f32.mrf.mxu0
    %v602 = vadd.f32 0.0, %v601
    %v603 = vpop.f32.mrf.mxu0
    %v604 = vadd.f32 0.0, %v603
    %605 = vmatprep.mubr.f32.mxu0 0.0
    %606 = vmatmul.mubr.f32.gmra.mxu0 %v435
    %v607 = vpop.f32.mrf.mxu0
    %v608 = vadd.f32 0.0, %v607
    %v609 = vpop.f32.mrf.mxu0
    %v610 = vadd.f32 0.0, %v609
    %611 = vmatprep.mubr.f32.mxu0 0.0
    %612 = vmatmul.mubr.f32.gmra.mxu0 %v438
    %v613 = vpop.f32.mrf.mxu0
    %v614 = vadd.f32 0.0, %v613
    %v615 = vpop.f32.mrf.mxu0
    %v616 = vadd.f32 0.0, %v615
    %617 = vdwg.mxu0
    %v618 = vadd.f32 %v507, %v596
    %v619 = vadd.f32 %v509, %v598
    %v620 = vadd.f32 %v513, %v602
    %v621 = vadd.f32 %v515, %v604
    %v622 = vadd.f32 %v519, %v608
    %v623 = vadd.f32 %v521, %v610
    %v624 = vadd.f32 %v525, %v614
    %v625 = vadd.f32 %v527, %v616
    %v626 = vadd.f32 %v618, %v619
    %627 = vadd.xlane.f32.xlu0 %v626
    %v628 = vpop.xlane.xlu0 %627
    %v629 = vadd.f32 %v620, %v621
    %630 = vadd.xlane.f32.xlu0 %v629
    %v631 = vpop.xlane.xlu0 %630
    %v632 = vadd.f32 %v622, %v623
    %633 = vadd.xlane.f32.xlu0 %v632
    %v634 = vpop.xlane.xlu0 %633
    %v635 = vadd.f32 %v624, %v625
    %636 = vadd.xlane.f32.xlu0 %v635
    %v637 = vpop.xlane.xlu0 %636
    %v638 = vmul.f32 %v507, %v507
    %v639 = vmul.f32 %v509, %v509
    %v640 = vmul.f32 %v513, %v513
    %v641 = vmul.f32 %v515, %v515
    %v642 = vmul.f32 %v519, %v519
    %v643 = vmul.f32 %v521, %v521
    %v644 = vmul.f32 %v525, %v525
    %v645 = vmul.f32 %v527, %v527
    %v646 = vmul.f32 %v596, %v596
    %v647 = vmul.f32 %v598, %v598
    %v648 = vmul.f32 %v602, %v602
    %v649 = vmul.f32 %v604, %v604
    %v650 = vmul.f32 %v608, %v608
    %v651 = vmul.f32 %v610, %v610
    %v652 = vmul.f32 %v614, %v614
    %v653 = vmul.f32 %v616, %v616
    %v654 = vadd.f32 %v638, %v646
    %v655 = vadd.f32 %v639, %v647
    %v656 = vadd.f32 %v640, %v648
    %v657 = vadd.f32 %v641, %v649
    %v658 = vadd.f32 %v642, %v650
    %v659 = vadd.f32 %v643, %v651
    %v660 = vadd.f32 %v644, %v652
    %v661 = vadd.f32 %v645, %v653
    %v662 = vadd.f32 %v654, %v655
    %663 = vadd.xlane.f32.xlu0 %v662
    %v664 = vpop.xlane.xlu0 %663
    %v665 = vadd.f32 %v656, %v657
    %666 = vadd.xlane.f32.xlu0 %v665
    %v667 = vpop.xlane.xlu0 %666
    %v668 = vadd.f32 %v658, %v659
    %669 = vadd.xlane.f32.xlu0 %v668
    %v670 = vpop.xlane.xlu0 %669
    %v671 = vadd.f32 %v660, %v661
    %672 = vadd.xlane.f32.xlu0 %v671
    %v673 = vpop.xlane.xlu0 %672
    %v674 = vmul.f32 %v628, 0.001953125
    %v675 = vmul.f32 %v631, 0.001953125
    %v676 = vmul.f32 %v634, 0.001953125
    %v677 = vmul.f32 %v637, 0.001953125
    %v678 = vmul.f32 %v664, 0.001953125
    %v679 = vmul.f32 %v667, 0.001953125
    %v680 = vmul.f32 %v670, 0.001953125
    %v681 = vmul.f32 %v673, 0.001953125
    %v682 = vmul.f32 %v674, %v674
    %v683 = vmul.f32 %v675, %v675
    %v684 = vmul.f32 %v676, %v676
    %v685 = vmul.f32 %v677, %v677
    %v686 = vsub.f32 %v678, %v682
    %v687 = vsub.f32 %v679, %v683
    %v688 = vsub.f32 %v680, %v684
    %v689 = vsub.f32 %v681, %v685
    %s690 = scalar_lea.vmem %s5, 64
    %v691 = vld [vmem:[%s690] sm:$0xff]
    %v692 = vld [vmem:[%s690 + $0x8] sm:$0xff]
    %v693 = vld [vmem:[%s690 + $0x10] sm:$0xff]
    %v694 = vld [vmem:[%s690 + $0x18] sm:$0xff]
    %s695 = scalar_lea.vmem %s5, 96
    %v696 = vld [vmem:[%s695] sm:$0xff]
    %v697 = vld [vmem:[%s695 + $0x8] sm:$0xff]
    %v698 = vld [vmem:[%s695 + $0x10] sm:$0xff]
    %v699 = vld [vmem:[%s695 + $0x18] sm:$0xff]
    %v700 = vadd.f32 %v686, 1e-05
    %v701 = vadd.f32 %v687, 1e-05
    %v702 = vadd.f32 %v688, 1e-05
    %v703 = vadd.f32 %v689, 1e-05
    %v704 = vrsqrt.pop %v700
    %v705 = vrsqrt.pop %v701
    %v706 = vrsqrt.pop %v702
    %v707 = vrsqrt.pop %v703
    %v708 = vmul.f32 %v691, %v704
    %v709 = vmul.f32 %v692, %v705
    %v710 = vmul.f32 %v693, %v706
    %v711 = vmul.f32 %v694, %v707
    %v712 = vmul.f32 %v674, %v708
    %v713 = vmul.f32 %v675, %v709
    %v714 = vmul.f32 %v676, %v710
    %v715 = vmul.f32 %v677, %v711
    %v716 = vsub.f32 %v696, %v712
    %v717 = vsub.f32 %v697, %v713
    %v718 = vsub.f32 %v698, %v714
    %v719 = vsub.f32 %v699, %v715
    %721 = vset.pattern.permute.xlu0 0
    %722 = vperm.xlu0 %721, %v708
    %v723 = vpop.permute.xlu0 %722
    %726 = vset.pattern.permute.xlu0 0
    %727 = vperm.xlu0 %726, %v709
    %v728 = vpop.permute.xlu0 %727
    %731 = vset.pattern.permute.xlu0 0
    %732 = vperm.xlu0 %731, %v710
    %v733 = vpop.permute.xlu0 %732
    %736 = vset.pattern.permute.xlu0 0
    %737 = vperm.xlu0 %736, %v711
    %v738 = vpop.permute.xlu0 %737
    %v740 = vmul.f32 %v507, %v723
    %v741 = vmul.f32 %v509, %v723
    %v742 = vmul.f32 %v513, %v728
    %v743 = vmul.f32 %v515, %v728
    %v744 = vmul.f32 %v519, %v733
    %v745 = vmul.f32 %v521, %v733
    %v746 = vmul.f32 %v525, %v738
    %v747 = vmul.f32 %v527, %v738
    %v748 = vmul.f32 %v596, %v723
    %v749 = vmul.f32 %v598, %v723
    %v750 = vmul.f32 %v602, %v728
    %v751 = vmul.f32 %v604, %v728
    %v752 = vmul.f32 %v608, %v733
    %v753 = vmul.f32 %v610, %v733
    %v754 = vmul.f32 %v614, %v738
    %v755 = vmul.f32 %v616, %v738
    %757 = vset.pattern.permute.xlu0 0
    %758 = vperm.xlu0 %757, %v716
    %v759 = vpop.permute.xlu0 %758
    %762 = vset.pattern.permute.xlu0 0
    %763 = vperm.xlu0 %762, %v717
    %v764 = vpop.permute.xlu0 %763
    %767 = vset.pattern.permute.xlu0 0
    %768 = vperm.xlu0 %767, %v718
    %v769 = vpop.permute.xlu0 %768
    %772 = vset.pattern.permute.xlu0 0
    %773 = vperm.xlu0 %772, %v719
    %v774 = vpop.permute.xlu0 %773
    %v776 = vadd.f32 %v740, %v759
    %v777 = vadd.f32 %v741, %v759
    %v778 = vadd.f32 %v742, %v764
    %v779 = vadd.f32 %v743, %v764
    %v780 = vadd.f32 %v744, %v769
    %v781 = vadd.f32 %v745, %v769
    %v782 = vadd.f32 %v746, %v774
    %v783 = vadd.f32 %v747, %v774
    %v784 = vadd.f32 %v748, %v759
    %v785 = vadd.f32 %v749, %v759
    %v786 = vadd.f32 %v750, %v764
    %v787 = vadd.f32 %v751, %v764
    %v788 = vadd.f32 %v752, %v769
    %v789 = vadd.f32 %v753, %v769
    %v790 = vadd.f32 %v754, %v774
    %v791 = vadd.f32 %v755, %v774
    %v792 = vmax.f32 %v776, 0.0
    %v793 = vmax.f32 %v777, 0.0
    %v794 = vmax.f32 %v778, 0.0
    %v795 = vmax.f32 %v779, 0.0
    %v796 = vmax.f32 %v780, 0.0
    %v797 = vmax.f32 %v781, 0.0
    %v798 = vmax.f32 %v782, 0.0
    %v799 = vmax.f32 %v783, 0.0
    %v800 = vmax.f32 %v784, 0.0
    %v801 = vmax.f32 %v785, 0.0
    %v802 = vmax.f32 %v786, 0.0
    %v803 = vmax.f32 %v787, 0.0
    %v804 = vmax.f32 %v788, 0.0
    %v805 = vmax.f32 %v789, 0.0
    %v806 = vmax.f32 %v790, 0.0
    %v807 = vmax.f32 %v791, 0.0
    %v808 = vld [vmem:[%s3] sm:$0xff]
    %v809 = vld [vmem:[%s3 + $0x8] sm:$0xff]
    %v810 = vld [vmem:[%s3 + $0x10] sm:$0xff]
    %v811 = vld [vmem:[%s3 + $0x18] sm:$0xff]
    %v813 = vsel %vm427, %v808, 0
    %v816 = vsel %vm427, %v809, 0
    %v819 = vsel %vm427, %v810, 0
    %v822 = vsel %vm427, %v811, 0
    %824 = vmatprep.subr.mxu0 0.0
    %825 = vmatpush1.msra.mxu0 0.0
    %826 = vmatprep.subr.mxu0 0.0
    %827 = vmatpush1.msra.mxu0 0.0
    %828 = vmatprep.subr.mxu0 0.0
    %829 = vmatpush1.msra.mxu0 0.0
    %830 = vmatprep.subr.mxu0 0.0
    %831 = vmatpush1.msra.mxu0 0.0
    %832 = vmatprep.subr.mxu0 0.0
    %833 = vmatpush1.msra.mxu0 0.0
    %834 = vmatprep.subr.mxu0 0.0
    %835 = vmatpush1.msra.mxu0 0.0
    %836 = vmatprep.subr.mxu0 0.0
    %837 = vmatpush1.msra.mxu0 0.0
    %838 = vmatprep.subr.mxu0 0.0
    %839 = vmatpush1.msra.mxu0 0.0
    %840 = vmatprep.subr.mxu0 0.0
    %841 = vmatpush1.msra.mxu0 0.0
    %842 = vmatprep.subr.mxu0 0.0
    %843 = vmatpush1.msra.mxu0 0.0
    %844 = vmatprep.subr.mxu0 0.0
    %845 = vmatpush1.msra.mxu0 0.0
    %846 = vmatprep.subr.mxu0 0.0
    %847 = vmatpush1.msra.mxu0 0.0
    %848 = vmatprep.subr.mxu0 %v799
    %849 = vmatpush1.msra.mxu0 %v798
    %850 = vmatprep.subr.mxu0 %v797
    %851 = vmatpush1.msra.mxu0 %v796
    %852 = vmatprep.subr.mxu0 %v795
    %853 = vmatpush1.msra.mxu0 %v794
    %854 = vmatprep.subr.mxu0 %v793
    %855 = vmatpush1.msra.mxu0 %v792
    %856 = vmatprep.subr.mxu0 0.0
    %857 = vmatpush2.msra.mxu0 0.0
    %858 = vmatprep.subr.mxu0 0.0
    %859 = vmatpush2.msra.mxu0 0.0
    %860 = vmatprep.subr.mxu0 0.0
    %861 = vmatpush2.msra.mxu0 0.0
    %862 = vmatprep.subr.mxu0 0.0
    %863 = vmatpush2.msra.mxu0 0.0
    %864 = vmatprep.subr.mxu0 0.0
    %865 = vmatpush2.msra.mxu0 0.0
    %866 = vmatprep.subr.mxu0 0.0
    %867 = vmatpush2.msra.mxu0 0.0
    %868 = vmatprep.subr.mxu0 0.0
    %869 = vmatpush2.msra.mxu0 0.0
    %870 = vmatprep.subr.mxu0 0.0
    %871 = vmatpush2.msra.mxu0 0.0
    %872 = vmatprep.subr.mxu0 0.0
    %873 = vmatpush2.msra.mxu0 0.0
    %874 = vmatprep.subr.mxu0 0.0
    %875 = vmatpush2.msra.mxu0 0.0
    %876 = vmatprep.subr.mxu0 0.0
    %877 = vmatpush2.msra.mxu0 0.0
    %878 = vmatprep.subr.mxu0 0.0
    %879 = vmatpush2.msra.mxu0 0.0
    %880 = vmatprep.subr.mxu0 0.0
    %881 = vmatpush2.msra.mxu0 0.0
    %882 = vmatprep.subr.mxu0 0.0
    %883 = vmatpush2.msra.mxu0 0.0
    %884 = vmatprep.subr.mxu0 0.0
    %885 = vmatpush2.msra.mxu0 0.0
    %886 = vmatprep.subr.mxu0 0.0
    %887 = vmatpush2.msra.mxu0 0.0
    %888 = vmatprep.mubr.f32.mxu0 0.0
    %889 = vmatmul.mubr.f32.gmra.mxu0 %v813
    %v890 = vpop.f32.mrf.mxu0
    %v891 = vadd.f32 0.0, %v890
    %v892 = vpop.f32.mrf.mxu0
    %v893 = vadd.f32 0.0, %v892
    %894 = vmatprep.mubr.f32.mxu0 0.0
    %895 = vmatmul.mubr.f32.gmra.mxu0 %v816
    %v896 = vpop.f32.mrf.mxu0
    %v897 = vadd.f32 0.0, %v896
    %v898 = vpop.f32.mrf.mxu0
    %v899 = vadd.f32 0.0, %v898
    %900 = vmatprep.mubr.f32.mxu0 0.0
    %901 = vmatmul.mubr.f32.gmra.mxu0 %v819
    %v902 = vpop.f32.mrf.mxu0
    %v903 = vadd.f32 0.0, %v902
    %v904 = vpop.f32.mrf.mxu0
    %v905 = vadd.f32 0.0, %v904
    %906 = vmatprep.mubr.f32.mxu0 0.0
    %907 = vmatmul.mubr.f32.gmra.mxu0 %v822
    %v908 = vpop.f32.mrf.mxu0
    %v909 = vadd.f32 0.0, %v908
    %v910 = vpop.f32.mrf.mxu0
    %v911 = vadd.f32 0.0, %v910
    %912 = vdwg.mxu0
    %913 = vmatprep.subr.mxu0 0.0
    %914 = vmatpush1.msra.mxu0 0.0
    %915 = vmatprep.subr.mxu0 0.0
    %916 = vmatpush1.msra.mxu0 0.0
    %917 = vmatprep.subr.mxu0 0.0
    %918 = vmatpush1.msra.mxu0 0.0
    %919 = vmatprep.subr.mxu0 0.0
    %920 = vmatpush1.msra.mxu0 0.0
    %921 = vmatprep.subr.mxu0 0.0
    %922 = vmatpush1.msra.mxu0 0.0
    %923 = vmatprep.subr.mxu0 0.0
    %924 = vmatpush1.msra.mxu0 0.0
    %925 = vmatprep.subr.mxu0 0.0
    %926 = vmatpush1.msra.mxu0 0.0
    %927 = vmatprep.subr.mxu0 0.0
    %928 = vmatpush1.msra.mxu0 0.0
    %929 = vmatprep.subr.mxu0 0.0
    %930 = vmatpush1.msra.mxu0 0.0
    %931 = vmatprep.subr.mxu0 0.0
    %932 = vmatpush1.msra.mxu0 0.0
    %933 = vmatprep.subr.mxu0 0.0
    %934 = vmatpush1.msra.mxu0 0.0
    %935 = vmatprep.subr.mxu0 0.0
    %936 = vmatpush1.msra.mxu0 0.0
    %937 = vmatprep.subr.mxu0 %v807
    %938 = vmatpush1.msra.mxu0 %v806
    %939 = vmatprep.subr.mxu0 %v805
    %940 = vmatpush1.msra.mxu0 %v804
    %941 = vmatprep.subr.mxu0 %v803
    %942 = vmatpush1.msra.mxu0 %v802
    %943 = vmatprep.subr.mxu0 %v801
    %944 = vmatpush1.msra.mxu0 %v800
    %945 = vmatprep.subr.mxu0 0.0
    %946 = vmatpush2.msra.mxu0 0.0
    %947 = vmatprep.subr.mxu0 0.0
    %948 = vmatpush2.msra.mxu0 0.0
    %949 = vmatprep.subr.mxu0 0.0
    %950 = vmatpush2.msra.mxu0 0.0
    %951 = vmatprep.subr.mxu0 0.0
    %952 = vmatpush2.msra.mxu0 0.0
    %953 = vmatprep.subr.mxu0 0.0
    %954 = vmatpush2.msra.mxu0 0.0
    %955 = vmatprep.subr.mxu0 0.0
    %956 = vmatpush2.msra.mxu0 0.0
    %957 = vmatprep.subr.mxu0 0.0
    %958 = vmatpush2.msra.mxu0 0.0
    %959 = vmatprep.subr.mxu0 0.0
    %960 = vmatpush2.msra.mxu0 0.0
    %961 = vmatprep.subr.mxu0 0.0
    %962 = vmatpush2.msra.mxu0 0.0
    %963 = vmatprep.subr.mxu0 0.0
    %964 = vmatpush2.msra.mxu0 0.0
    %965 = vmatprep.subr.mxu0 0.0
    %966 = vmatpush2.msra.mxu0 0.0
    %967 = vmatprep.subr.mxu0 0.0
    %968 = vmatpush2.msra.mxu0 0.0
    %969 = vmatprep.subr.mxu0 0.0
    %970 = vmatpush2.msra.mxu0 0.0
    %971 = vmatprep.subr.mxu0 0.0
    %972 = vmatpush2.msra.mxu0 0.0
    %973 = vmatprep.subr.mxu0 0.0
    %974 = vmatpush2.msra.mxu0 0.0
    %975 = vmatprep.subr.mxu0 0.0
    %976 = vmatpush2.msra.mxu0 0.0
    %977 = vmatprep.mubr.f32.mxu0 0.0
    %978 = vmatmul.mubr.f32.gmra.mxu0 %v813
    %v979 = vpop.f32.mrf.mxu0
    %v980 = vadd.f32 0.0, %v979
    %v981 = vpop.f32.mrf.mxu0
    %v982 = vadd.f32 0.0, %v981
    %983 = vmatprep.mubr.f32.mxu0 0.0
    %984 = vmatmul.mubr.f32.gmra.mxu0 %v816
    %v985 = vpop.f32.mrf.mxu0
    %v986 = vadd.f32 0.0, %v985
    %v987 = vpop.f32.mrf.mxu0
    %v988 = vadd.f32 0.0, %v987
    %989 = vmatprep.mubr.f32.mxu0 0.0
    %990 = vmatmul.mubr.f32.gmra.mxu0 %v819
    %v991 = vpop.f32.mrf.mxu0
    %v992 = vadd.f32 0.0, %v991
    %v993 = vpop.f32.mrf.mxu0
    %v994 = vadd.f32 0.0, %v993
    %995 = vmatprep.mubr.f32.mxu0 0.0
    %996 = vmatmul.mubr.f32.gmra.mxu0 %v822
    %v997 = vpop.f32.mrf.mxu0
    %v998 = vadd.f32 0.0, %v997
    %v999 = vpop.f32.mrf.mxu0
    %v1000 = vadd.f32 0.0, %v999
    %1001 = vdwg.mxu0
    %v1002 = vadd.f32 %v891, %v980
    %v1003 = vadd.f32 %v893, %v982
    %v1004 = vadd.f32 %v897, %v986
    %v1005 = vadd.f32 %v899, %v988
    %v1006 = vadd.f32 %v903, %v992
    %v1007 = vadd.f32 %v905, %v994
    %v1008 = vadd.f32 %v909, %v998
    %v1009 = vadd.f32 %v911, %v1000
    %v1010 = vadd.f32 %v1002, %v1003
    %1011 = vadd.xlane.f32.xlu0 %v1010
    %v1012 = vpop.xlane.xlu0 %1011
    %v1013 = vadd.f32 %v1004, %v1005
    %1014 = vadd.xlane.f32.xlu0 %v1013
    %v1015 = vpop.xlane.xlu0 %1014
    %v1016 = vadd.f32 %v1006, %v1007
    %1017 = vadd.xlane.f32.xlu0 %v1016
    %v1018 = vpop.xlane.xlu0 %1017
    %v1019 = vadd.f32 %v1008, %v1009
    %1020 = vadd.xlane.f32.xlu0 %v1019
    %v1021 = vpop.xlane.xlu0 %1020
    %v1022 = vmul.f32 %v891, %v891
    %v1023 = vmul.f32 %v893, %v893
    %v1024 = vmul.f32 %v897, %v897
    %v1025 = vmul.f32 %v899, %v899
    %v1026 = vmul.f32 %v903, %v903
    %v1027 = vmul.f32 %v905, %v905
    %v1028 = vmul.f32 %v909, %v909
    %v1029 = vmul.f32 %v911, %v911
    %v1030 = vmul.f32 %v980, %v980
    %v1031 = vmul.f32 %v982, %v982
    %v1032 = vmul.f32 %v986, %v986
    %v1033 = vmul.f32 %v988, %v988
    %v1034 = vmul.f32 %v992, %v992
    %v1035 = vmul.f32 %v994, %v994
    %v1036 = vmul.f32 %v998, %v998
    %v1037 = vmul.f32 %v1000, %v1000
    %v1038 = vadd.f32 %v1022, %v1030
    %v1039 = vadd.f32 %v1023, %v1031
    %v1040 = vadd.f32 %v1024, %v1032
    %v1041 = vadd.f32 %v1025, %v1033
    %v1042 = vadd.f32 %v1026, %v1034
    %v1043 = vadd.f32 %v1027, %v1035
    %v1044 = vadd.f32 %v1028, %v1036
    %v1045 = vadd.f32 %v1029, %v1037
    %v1046 = vadd.f32 %v1038, %v1039
    %1047 = vadd.xlane.f32.xlu0 %v1046
    %v1048 = vpop.xlane.xlu0 %1047
    %v1049 = vadd.f32 %v1040, %v1041
    %1050 = vadd.xlane.f32.xlu0 %v1049
    %v1051 = vpop.xlane.xlu0 %1050
    %v1052 = vadd.f32 %v1042, %v1043
    %1053 = vadd.xlane.f32.xlu0 %v1052
    %v1054 = vpop.xlane.xlu0 %1053
    %v1055 = vadd.f32 %v1044, %v1045
    %1056 = vadd.xlane.f32.xlu0 %v1055
    %v1057 = vpop.xlane.xlu0 %1056
    %v1058 = vmul.f32 %v1012, 0.001953125
    %v1059 = vmul.f32 %v1015, 0.001953125
    %v1060 = vmul.f32 %v1018, 0.001953125
    %v1061 = vmul.f32 %v1021, 0.001953125
    %v1062 = vmul.f32 %v1048, 0.001953125
    %v1063 = vmul.f32 %v1051, 0.001953125
    %v1064 = vmul.f32 %v1054, 0.001953125
    %v1065 = vmul.f32 %v1057, 0.001953125
    %v1066 = vmul.f32 %v1058, %v1058
    %v1067 = vmul.f32 %v1059, %v1059
    %v1068 = vmul.f32 %v1060, %v1060
    %v1069 = vmul.f32 %v1061, %v1061
    %v1070 = vsub.f32 %v1062, %v1066
    %v1071 = vsub.f32 %v1063, %v1067
    %v1072 = vsub.f32 %v1064, %v1068
    %v1073 = vsub.f32 %v1065, %v1069
    %s1074 = scalar_lea.vmem %s5, 128
    %v1075 = vld [vmem:[%s1074] sm:$0xff]
    %v1076 = vld [vmem:[%s1074 + $0x8] sm:$0xff]
    %v1077 = vld [vmem:[%s1074 + $0x10] sm:$0xff]
    %v1078 = vld [vmem:[%s1074 + $0x18] sm:$0xff]
    %s1079 = scalar_lea.vmem %s5, 160
    %v1080 = vld [vmem:[%s1079] sm:$0xff]
    %v1081 = vld [vmem:[%s1079 + $0x8] sm:$0xff]
    %v1082 = vld [vmem:[%s1079 + $0x10] sm:$0xff]
    %v1083 = vld [vmem:[%s1079 + $0x18] sm:$0xff]
    %v1084 = vadd.f32 %v1070, 1e-05
    %v1085 = vadd.f32 %v1071, 1e-05
    %v1086 = vadd.f32 %v1072, 1e-05
    %v1087 = vadd.f32 %v1073, 1e-05
    %v1088 = vrsqrt.pop %v1084
    %v1089 = vrsqrt.pop %v1085
    %v1090 = vrsqrt.pop %v1086
    %v1091 = vrsqrt.pop %v1087
    %v1092 = vmul.f32 %v1075, %v1088
    %v1093 = vmul.f32 %v1076, %v1089
    %v1094 = vmul.f32 %v1077, %v1090
    %v1095 = vmul.f32 %v1078, %v1091
    %v1096 = vmul.f32 %v1058, %v1092
    %v1097 = vmul.f32 %v1059, %v1093
    %v1098 = vmul.f32 %v1060, %v1094
    %v1099 = vmul.f32 %v1061, %v1095
    %v1100 = vsub.f32 %v1080, %v1096
    %v1101 = vsub.f32 %v1081, %v1097
    %v1102 = vsub.f32 %v1082, %v1098
    %v1103 = vsub.f32 %v1083, %v1099
    %1105 = vset.pattern.permute.xlu0 0
    %1106 = vperm.xlu0 %1105, %v1092
    %v1107 = vpop.permute.xlu0 %1106
    %1110 = vset.pattern.permute.xlu0 0
    %1111 = vperm.xlu0 %1110, %v1093
    %v1112 = vpop.permute.xlu0 %1111
    %1115 = vset.pattern.permute.xlu0 0
    %1116 = vperm.xlu0 %1115, %v1094
    %v1117 = vpop.permute.xlu0 %1116
    %1120 = vset.pattern.permute.xlu0 0
    %1121 = vperm.xlu0 %1120, %v1095
    %v1122 = vpop.permute.xlu0 %1121
    %v1124 = vmul.f32 %v891, %v1107
    %v1125 = vmul.f32 %v893, %v1107
    %v1126 = vmul.f32 %v897, %v1112
    %v1127 = vmul.f32 %v899, %v1112
    %v1128 = vmul.f32 %v903, %v1117
    %v1129 = vmul.f32 %v905, %v1117
    %v1130 = vmul.f32 %v909, %v1122
    %v1131 = vmul.f32 %v911, %v1122
    %v1132 = vmul.f32 %v980, %v1107
    %v1133 = vmul.f32 %v982, %v1107
    %v1134 = vmul.f32 %v986, %v1112
    %v1135 = vmul.f32 %v988, %v1112
    %v1136 = vmul.f32 %v992, %v1117
    %v1137 = vmul.f32 %v994, %v1117
    %v1138 = vmul.f32 %v998, %v1122
    %v1139 = vmul.f32 %v1000, %v1122
    %1141 = vset.pattern.permute.xlu0 0
    %1142 = vperm.xlu0 %1141, %v1100
    %v1143 = vpop.permute.xlu0 %1142
    %1146 = vset.pattern.permute.xlu0 0
    %1147 = vperm.xlu0 %1146, %v1101
    %v1148 = vpop.permute.xlu0 %1147
    %1151 = vset.pattern.permute.xlu0 0
    %1152 = vperm.xlu0 %1151, %v1102
    %v1153 = vpop.permute.xlu0 %1152
    %1156 = vset.pattern.permute.xlu0 0
    %1157 = vperm.xlu0 %1156, %v1103
    %v1158 = vpop.permute.xlu0 %1157
    %v1160 = vadd.f32 %v1124, %v1143
    %v1161 = vadd.f32 %v1125, %v1143
    %v1162 = vadd.f32 %v1126, %v1148
    %v1163 = vadd.f32 %v1127, %v1148
    %v1164 = vadd.f32 %v1128, %v1153
    %v1165 = vadd.f32 %v1129, %v1153
    %v1166 = vadd.f32 %v1130, %v1158
    %v1167 = vadd.f32 %v1131, %v1158
    %v1168 = vadd.f32 %v1132, %v1143
    %v1169 = vadd.f32 %v1133, %v1143
    %v1170 = vadd.f32 %v1134, %v1148
    %v1171 = vadd.f32 %v1135, %v1148
    %v1172 = vadd.f32 %v1136, %v1153
    %v1173 = vadd.f32 %v1137, %v1153
    %v1174 = vadd.f32 %v1138, %v1158
    %v1175 = vadd.f32 %v1139, %v1158
    %v1176 = vmax.f32 %v1160, 0.0
    %v1177 = vmax.f32 %v1161, 0.0
    %v1178 = vmax.f32 %v1162, 0.0
    %v1179 = vmax.f32 %v1163, 0.0
    %v1180 = vmax.f32 %v1164, 0.0
    %v1181 = vmax.f32 %v1165, 0.0
    %v1182 = vmax.f32 %v1166, 0.0
    %v1183 = vmax.f32 %v1167, 0.0
    %v1184 = vmax.f32 %v1168, 0.0
    %v1185 = vmax.f32 %v1169, 0.0
    %v1186 = vmax.f32 %v1170, 0.0
    %v1187 = vmax.f32 %v1171, 0.0
    %v1188 = vmax.f32 %v1172, 0.0
    %v1189 = vmax.f32 %v1173, 0.0
    %v1190 = vmax.f32 %v1174, 0.0
    %v1191 = vmax.f32 %v1175, 0.0
    %v1192 = vld [vmem:[%s4] sm:$0xff]
    %v1193 = vld [vmem:[%s4 + $0x8] sm:$0xff]
    %v1194 = vld [vmem:[%s4 + $0x10] sm:$0xff]
    %v1195 = vld [vmem:[%s4 + $0x18] sm:$0xff]
    %v1197 = vsel %vm427, %v1192, 0
    %v1200 = vsel %vm427, %v1193, 0
    %v1203 = vsel %vm427, %v1194, 0
    %v1206 = vsel %vm427, %v1195, 0
    %1208 = vmatprep.subr.mxu0 0.0
    %1209 = vmatpush1.msra.mxu0 0.0
    %1210 = vmatprep.subr.mxu0 0.0
    %1211 = vmatpush1.msra.mxu0 0.0
    %1212 = vmatprep.subr.mxu0 0.0
    %1213 = vmatpush1.msra.mxu0 0.0
    %1214 = vmatprep.subr.mxu0 0.0
    %1215 = vmatpush1.msra.mxu0 0.0
    %1216 = vmatprep.subr.mxu0 0.0
    %1217 = vmatpush1.msra.mxu0 0.0
    %1218 = vmatprep.subr.mxu0 0.0
    %1219 = vmatpush1.msra.mxu0 0.0
    %1220 = vmatprep.subr.mxu0 0.0
    %1221 = vmatpush1.msra.mxu0 0.0
    %1222 = vmatprep.subr.mxu0 0.0
    %1223 = vmatpush1.msra.mxu0 0.0
    %1224 = vmatprep.subr.mxu0 0.0
    %1225 = vmatpush1.msra.mxu0 0.0
    %1226 = vmatprep.subr.mxu0 0.0
    %1227 = vmatpush1.msra.mxu0 0.0
    %1228 = vmatprep.subr.mxu0 0.0
    %1229 = vmatpush1.msra.mxu0 0.0
    %1230 = vmatprep.subr.mxu0 0.0
    %1231 = vmatpush1.msra.mxu0 0.0
    %1232 = vmatprep.subr.mxu0 %v1183
    %1233 = vmatpush1.msra.mxu0 %v1182
    %1234 = vmatprep.subr.mxu0 %v1181
    %1235 = vmatpush1.msra.mxu0 %v1180
    %1236 = vmatprep.subr.mxu0 %v1179
    %1237 = vmatpush1.msra.mxu0 %v1178
    %1238 = vmatprep.subr.mxu0 %v1177
    %1239 = vmatpush1.msra.mxu0 %v1176
    %1240 = vmatprep.subr.mxu0 0.0
    %1241 = vmatpush2.msra.mxu0 0.0
    %1242 = vmatprep.subr.mxu0 0.0
    %1243 = vmatpush2.msra.mxu0 0.0
    %1244 = vmatprep.subr.mxu0 0.0
    %1245 = vmatpush2.msra.mxu0 0.0
    %1246 = vmatprep.subr.mxu0 0.0
    %1247 = vmatpush2.msra.mxu0 0.0
    %1248 = vmatprep.subr.mxu0 0.0
    %1249 = vmatpush2.msra.mxu0 0.0
    %1250 = vmatprep.subr.mxu0 0.0
    %1251 = vmatpush2.msra.mxu0 0.0
    %1252 = vmatprep.subr.mxu0 0.0
    %1253 = vmatpush2.msra.mxu0 0.0
    %1254 = vmatprep.subr.mxu0 0.0
    %1255 = vmatpush2.msra.mxu0 0.0
    %1256 = vmatprep.subr.mxu0 0.0
    %1257 = vmatpush2.msra.mxu0 0.0
    %1258 = vmatprep.subr.mxu0 0.0
    %1259 = vmatpush2.msra.mxu0 0.0
    %1260 = vmatprep.subr.mxu0 0.0
    %1261 = vmatpush2.msra.mxu0 0.0
    %1262 = vmatprep.subr.mxu0 0.0
    %1263 = vmatpush2.msra.mxu0 0.0
    %1264 = vmatprep.subr.mxu0 0.0
    %1265 = vmatpush2.msra.mxu0 0.0
    %1266 = vmatprep.subr.mxu0 0.0
    %1267 = vmatpush2.msra.mxu0 0.0
    %1268 = vmatprep.subr.mxu0 0.0
    %1269 = vmatpush2.msra.mxu0 0.0
    %1270 = vmatprep.subr.mxu0 0.0
    %1271 = vmatpush2.msra.mxu0 0.0
    %1272 = vmatprep.mubr.f32.mxu0 0.0
    %1273 = vmatmul.mubr.f32.gmra.mxu0 %v1197
    %v1274 = vpop.f32.mrf.mxu0
    %v1275 = vadd.f32 0.0, %v1274
    %v1276 = vpop.f32.mrf.mxu0
    %v1277 = vadd.f32 0.0, %v1276
    %1278 = vmatprep.mubr.f32.mxu0 0.0
    %1279 = vmatmul.mubr.f32.gmra.mxu0 %v1200
    %v1280 = vpop.f32.mrf.mxu0
    %v1281 = vadd.f32 0.0, %v1280
    %v1282 = vpop.f32.mrf.mxu0
    %v1283 = vadd.f32 0.0, %v1282
    %1284 = vmatprep.mubr.f32.mxu0 0.0
    %1285 = vmatmul.mubr.f32.gmra.mxu0 %v1203
    %v1286 = vpop.f32.mrf.mxu0
    %v1287 = vadd.f32 0.0, %v1286
    %v1288 = vpop.f32.mrf.mxu0
    %v1289 = vadd.f32 0.0, %v1288
    %1290 = vmatprep.mubr.f32.mxu0 0.0
    %1291 = vmatmul.mubr.f32.gmra.mxu0 %v1206
    %v1292 = vpop.f32.mrf.mxu0
    %v1293 = vadd.f32 0.0, %v1292
    %v1294 = vpop.f32.mrf.mxu0
    %v1295 = vadd.f32 0.0, %v1294
    %1296 = vdwg.mxu0
    %1297 = vmatprep.subr.mxu0 0.0
    %1298 = vmatpush1.msra.mxu0 0.0
    %1299 = vmatprep.subr.mxu0 0.0
    %1300 = vmatpush1.msra.mxu0 0.0
    %1301 = vmatprep.subr.mxu0 0.0
    %1302 = vmatpush1.msra.mxu0 0.0
    %1303 = vmatprep.subr.mxu0 0.0
    %1304 = vmatpush1.msra.mxu0 0.0
    %1305 = vmatprep.subr.mxu0 0.0
    %1306 = vmatpush1.msra.mxu0 0.0
    %1307 = vmatprep.subr.mxu0 0.0
    %1308 = vmatpush1.msra.mxu0 0.0
    %1309 = vmatprep.subr.mxu0 0.0
    %1310 = vmatpush1.msra.mxu0 0.0
    %1311 = vmatprep.subr.mxu0 0.0
    %1312 = vmatpush1.msra.mxu0 0.0
    %1313 = vmatprep.subr.mxu0 0.0
    %1314 = vmatpush1.msra.mxu0 0.0
    %1315 = vmatprep.subr.mxu0 0.0
    %1316 = vmatpush1.msra.mxu0 0.0
    %1317 = vmatprep.subr.mxu0 0.0
    %1318 = vmatpush1.msra.mxu0 0.0
    %1319 = vmatprep.subr.mxu0 0.0
    %1320 = vmatpush1.msra.mxu0 0.0
    %1321 = vmatprep.subr.mxu0 %v1191
    %1322 = vmatpush1.msra.mxu0 %v1190
    %1323 = vmatprep.subr.mxu0 %v1189
    %1324 = vmatpush1.msra.mxu0 %v1188
    %1325 = vmatprep.subr.mxu0 %v1187
    %1326 = vmatpush1.msra.mxu0 %v1186
    %1327 = vmatprep.subr.mxu0 %v1185
    %1328 = vmatpush1.msra.mxu0 %v1184
    %1329 = vmatprep.subr.mxu0 0.0
    %1330 = vmatpush2.msra.mxu0 0.0
    %1331 = vmatprep.subr.mxu0 0.0
    %1332 = vmatpush2.msra.mxu0 0.0
    %1333 = vmatprep.subr.mxu0 0.0
    %1334 = vmatpush2.msra.mxu0 0.0
    %1335 = vmatprep.subr.mxu0 0.0
    %1336 = vmatpush2.msra.mxu0 0.0
    %1337 = vmatprep.subr.mxu0 0.0
    %1338 = vmatpush2.msra.mxu0 0.0
    %1339 = vmatprep.subr.mxu0 0.0
    %1340 = vmatpush2.msra.mxu0 0.0
    %1341 = vmatprep.subr.mxu0 0.0
    %1342 = vmatpush2.msra.mxu0 0.0
    %1343 = vmatprep.subr.mxu0 0.0
    %1344 = vmatpush2.msra.mxu0 0.0
    %1345 = vmatprep.subr.mxu0 0.0
    %1346 = vmatpush2.msra.mxu0 0.0
    %1347 = vmatprep.subr.mxu0 0.0
    %1348 = vmatpush2.msra.mxu0 0.0
    %1349 = vmatprep.subr.mxu0 0.0
    %1350 = vmatpush2.msra.mxu0 0.0
    %1351 = vmatprep.subr.mxu0 0.0
    %1352 = vmatpush2.msra.mxu0 0.0
    %1353 = vmatprep.subr.mxu0 0.0
    %1354 = vmatpush2.msra.mxu0 0.0
    %1355 = vmatprep.subr.mxu0 0.0
    %1356 = vmatpush2.msra.mxu0 0.0
    %1357 = vmatprep.subr.mxu0 0.0
    %1358 = vmatpush2.msra.mxu0 0.0
    %1359 = vmatprep.subr.mxu0 0.0
    %1360 = vmatpush2.msra.mxu0 0.0
    %1361 = vmatprep.mubr.f32.mxu0 0.0
    %1362 = vmatmul.mubr.f32.gmra.mxu0 %v1197
    %v1363 = vpop.f32.mrf.mxu0
    %v1364 = vadd.f32 0.0, %v1363
    %v1365 = vpop.f32.mrf.mxu0
    %v1366 = vadd.f32 0.0, %v1365
    %1367 = vmatprep.mubr.f32.mxu0 0.0
    %1368 = vmatmul.mubr.f32.gmra.mxu0 %v1200
    %v1369 = vpop.f32.mrf.mxu0
    %v1370 = vadd.f32 0.0, %v1369
    %v1371 = vpop.f32.mrf.mxu0
    %v1372 = vadd.f32 0.0, %v1371
    %1373 = vmatprep.mubr.f32.mxu0 0.0
    %1374 = vmatmul.mubr.f32.gmra.mxu0 %v1203
    %v1375 = vpop.f32.mrf.mxu0
    %v1376 = vadd.f32 0.0, %v1375
    %v1377 = vpop.f32.mrf.mxu0
    %v1378 = vadd.f32 0.0, %v1377
    %1379 = vmatprep.mubr.f32.mxu0 0.0
    %1380 = vmatmul.mubr.f32.gmra.mxu0 %v1206
    %v1381 = vpop.f32.mrf.mxu0
    %v1382 = vadd.f32 0.0, %v1381
    %v1383 = vpop.f32.mrf.mxu0
    %v1384 = vadd.f32 0.0, %v1383
    %1385 = vdwg.mxu0
    %v1386 = vadd.f32 %v1275, %v1364
    %v1387 = vadd.f32 %v1277, %v1366
    %v1388 = vadd.f32 %v1281, %v1370
    %v1389 = vadd.f32 %v1283, %v1372
    %v1390 = vadd.f32 %v1287, %v1376
    %v1391 = vadd.f32 %v1289, %v1378
    %v1392 = vadd.f32 %v1293, %v1382
    %v1393 = vadd.f32 %v1295, %v1384
    %v1394 = vadd.f32 %v1386, %v1387
    %1395 = vadd.xlane.f32.xlu0 %v1394
    %v1396 = vpop.xlane.xlu0 %1395
    %v1397 = vadd.f32 %v1388, %v1389
    %1398 = vadd.xlane.f32.xlu0 %v1397
    %v1399 = vpop.xlane.xlu0 %1398
    %v1400 = vadd.f32 %v1390, %v1391
    %1401 = vadd.xlane.f32.xlu0 %v1400
    %v1402 = vpop.xlane.xlu0 %1401
    %v1403 = vadd.f32 %v1392, %v1393
    %1404 = vadd.xlane.f32.xlu0 %v1403
    %v1405 = vpop.xlane.xlu0 %1404
    %v1406 = vmul.f32 %v1275, %v1275
    %v1407 = vmul.f32 %v1277, %v1277
    %v1408 = vmul.f32 %v1281, %v1281
    %v1409 = vmul.f32 %v1283, %v1283
    %v1410 = vmul.f32 %v1287, %v1287
    %v1411 = vmul.f32 %v1289, %v1289
    %v1412 = vmul.f32 %v1293, %v1293
    %v1413 = vmul.f32 %v1295, %v1295
    %v1414 = vmul.f32 %v1364, %v1364
    %v1415 = vmul.f32 %v1366, %v1366
    %v1416 = vmul.f32 %v1370, %v1370
    %v1417 = vmul.f32 %v1372, %v1372
    %v1418 = vmul.f32 %v1376, %v1376
    %v1419 = vmul.f32 %v1378, %v1378
    %v1420 = vmul.f32 %v1382, %v1382
    %v1421 = vmul.f32 %v1384, %v1384
    %v1422 = vadd.f32 %v1406, %v1414
    %v1423 = vadd.f32 %v1407, %v1415
    %v1424 = vadd.f32 %v1408, %v1416
    %v1425 = vadd.f32 %v1409, %v1417
    %v1426 = vadd.f32 %v1410, %v1418
    %v1427 = vadd.f32 %v1411, %v1419
    %v1428 = vadd.f32 %v1412, %v1420
    %v1429 = vadd.f32 %v1413, %v1421
    %v1430 = vadd.f32 %v1422, %v1423
    %1431 = vadd.xlane.f32.xlu0 %v1430
    %v1432 = vpop.xlane.xlu0 %1431
    %v1433 = vadd.f32 %v1424, %v1425
    %1434 = vadd.xlane.f32.xlu0 %v1433
    %v1435 = vpop.xlane.xlu0 %1434
    %v1436 = vadd.f32 %v1426, %v1427
    %1437 = vadd.xlane.f32.xlu0 %v1436
    %v1438 = vpop.xlane.xlu0 %1437
    %v1439 = vadd.f32 %v1428, %v1429
    %1440 = vadd.xlane.f32.xlu0 %v1439
    %v1441 = vpop.xlane.xlu0 %1440
    %v1442 = vmul.f32 %v1396, 0.001953125
    %v1443 = vmul.f32 %v1399, 0.001953125
    %v1444 = vmul.f32 %v1402, 0.001953125
    %v1445 = vmul.f32 %v1405, 0.001953125
    %v1446 = vmul.f32 %v1432, 0.001953125
    %v1447 = vmul.f32 %v1435, 0.001953125
    %v1448 = vmul.f32 %v1438, 0.001953125
    %v1449 = vmul.f32 %v1441, 0.001953125
    %v1450 = vmul.f32 %v1442, %v1442
    %v1451 = vmul.f32 %v1443, %v1443
    %v1452 = vmul.f32 %v1444, %v1444
    %v1453 = vmul.f32 %v1445, %v1445
    %v1454 = vsub.f32 %v1446, %v1450
    %v1455 = vsub.f32 %v1447, %v1451
    %v1456 = vsub.f32 %v1448, %v1452
    %v1457 = vsub.f32 %v1449, %v1453
    %s1458 = scalar_lea.vmem %s5, 192
    %v1459 = vld [vmem:[%s1458] sm:$0xff]
    %v1460 = vld [vmem:[%s1458 + $0x8] sm:$0xff]
    %v1461 = vld [vmem:[%s1458 + $0x10] sm:$0xff]
    %v1462 = vld [vmem:[%s1458 + $0x18] sm:$0xff]
    %s1463 = scalar_lea.vmem %s5, 224
    %v1464 = vld [vmem:[%s1463] sm:$0xff]
    %v1465 = vld [vmem:[%s1463 + $0x8] sm:$0xff]
    %v1466 = vld [vmem:[%s1463 + $0x10] sm:$0xff]
    %v1467 = vld [vmem:[%s1463 + $0x18] sm:$0xff]
    %v1468 = vadd.f32 %v1454, 1e-05
    %v1469 = vadd.f32 %v1455, 1e-05
    %v1470 = vadd.f32 %v1456, 1e-05
    %v1471 = vadd.f32 %v1457, 1e-05
    %v1472 = vrsqrt.pop %v1468
    %v1473 = vrsqrt.pop %v1469
    %v1474 = vrsqrt.pop %v1470
    %v1475 = vrsqrt.pop %v1471
    %v1476 = vmul.f32 %v1459, %v1472
    %v1477 = vmul.f32 %v1460, %v1473
    %v1478 = vmul.f32 %v1461, %v1474
    %v1479 = vmul.f32 %v1462, %v1475
    %v1480 = vmul.f32 %v1442, %v1476
    %v1481 = vmul.f32 %v1443, %v1477
    %v1482 = vmul.f32 %v1444, %v1478
    %v1483 = vmul.f32 %v1445, %v1479
    %v1484 = vsub.f32 %v1464, %v1480
    %v1485 = vsub.f32 %v1465, %v1481
    %v1486 = vsub.f32 %v1466, %v1482
    %v1487 = vsub.f32 %v1467, %v1483
    %1489 = vset.pattern.permute.xlu0 0
    %1490 = vperm.xlu0 %1489, %v1476
    %v1491 = vpop.permute.xlu0 %1490
    %1494 = vset.pattern.permute.xlu0 0
    %1495 = vperm.xlu0 %1494, %v1477
    %v1496 = vpop.permute.xlu0 %1495
    %1499 = vset.pattern.permute.xlu0 0
    %1500 = vperm.xlu0 %1499, %v1478
    %v1501 = vpop.permute.xlu0 %1500
    %1504 = vset.pattern.permute.xlu0 0
    %1505 = vperm.xlu0 %1504, %v1479
    %v1506 = vpop.permute.xlu0 %1505
    %v1508 = vmul.f32 %v1275, %v1491
    %v1509 = vmul.f32 %v1277, %v1491
    %v1510 = vmul.f32 %v1281, %v1496
    %v1511 = vmul.f32 %v1283, %v1496
    %v1512 = vmul.f32 %v1287, %v1501
    %v1513 = vmul.f32 %v1289, %v1501
    %v1514 = vmul.f32 %v1293, %v1506
    %v1515 = vmul.f32 %v1295, %v1506
    %v1516 = vmul.f32 %v1364, %v1491
    %v1517 = vmul.f32 %v1366, %v1491
    %v1518 = vmul.f32 %v1370, %v1496
    %v1519 = vmul.f32 %v1372, %v1496
    %v1520 = vmul.f32 %v1376, %v1501
    %v1521 = vmul.f32 %v1378, %v1501
    %v1522 = vmul.f32 %v1382, %v1506
    %v1523 = vmul.f32 %v1384, %v1506
    %1525 = vset.pattern.permute.xlu0 0
    %1526 = vperm.xlu0 %1525, %v1484
    %v1527 = vpop.permute.xlu0 %1526
    %1530 = vset.pattern.permute.xlu0 0
    %1531 = vperm.xlu0 %1530, %v1485
    %v1532 = vpop.permute.xlu0 %1531
    %1535 = vset.pattern.permute.xlu0 0
    %1536 = vperm.xlu0 %1535, %v1486
    %v1537 = vpop.permute.xlu0 %1536
    %1540 = vset.pattern.permute.xlu0 0
    %1541 = vperm.xlu0 %1540, %v1487
    %v1542 = vpop.permute.xlu0 %1541
    %v1544 = vadd.f32 %v1508, %v1527
    %v1545 = vadd.f32 %v1509, %v1527
    %v1546 = vadd.f32 %v1510, %v1532
    %v1547 = vadd.f32 %v1511, %v1532
    %v1548 = vadd.f32 %v1512, %v1537
    %v1549 = vadd.f32 %v1513, %v1537
    %v1550 = vadd.f32 %v1514, %v1542
    %v1551 = vadd.f32 %v1515, %v1542
    %v1552 = vadd.f32 %v1516, %v1527
    %v1553 = vadd.f32 %v1517, %v1527
    %v1554 = vadd.f32 %v1518, %v1532
    %v1555 = vadd.f32 %v1519, %v1532
    %v1556 = vadd.f32 %v1520, %v1537
    %v1557 = vadd.f32 %v1521, %v1537
    %v1558 = vadd.f32 %v1522, %v1542
    %v1559 = vadd.f32 %v1523, %v1542
    %v1560 = vmax.f32 %v1544, 0.0
    %v1561 = vmax.f32 %v1545, 0.0
    %v1562 = vmax.f32 %v1546, 0.0
    %v1563 = vmax.f32 %v1547, 0.0
    %v1564 = vmax.f32 %v1548, 0.0
    %v1565 = vmax.f32 %v1549, 0.0
    %v1566 = vmax.f32 %v1550, 0.0
    %v1567 = vmax.f32 %v1551, 0.0
    %v1568 = vmax.f32 %v1552, 0.0
    %v1569 = vmax.f32 %v1553, 0.0
    %v1570 = vmax.f32 %v1554, 0.0
    %v1571 = vmax.f32 %v1555, 0.0
    %v1572 = vmax.f32 %v1556, 0.0
    %v1573 = vmax.f32 %v1557, 0.0
    %v1574 = vmax.f32 %v1558, 0.0
    %v1575 = vmax.f32 %v1559, 0.0
    %1576 = vst [vmem:[#allocation2] sm:$0xff] %v1560
    %1577 = vst [vmem:[#allocation2 + $0x8] sm:$0xff] %v1561
    %1578 = vst [vmem:[#allocation2 + $0x10] sm:$0xff] %v1562
    %1579 = vst [vmem:[#allocation2 + $0x18] sm:$0xff] %v1563
    %1580 = vst [vmem:[#allocation2 + $0x20] sm:$0xff] %v1564
    %1581 = vst [vmem:[#allocation2 + $0x28] sm:$0xff] %v1565
    %1582 = vst [vmem:[#allocation2 + $0x30] sm:$0xff] %v1566
    %1583 = vst [vmem:[#allocation2 + $0x38] sm:$0xff] %v1567
    %1584 = vst [vmem:[#allocation2 + $0x40] sm:$0xff] %v1568
    %1585 = vst [vmem:[#allocation2 + $0x48] sm:$0xff] %v1569
    %1586 = vst [vmem:[#allocation2 + $0x50] sm:$0xff] %v1570
    %1587 = vst [vmem:[#allocation2 + $0x58] sm:$0xff] %v1571
    %1588 = vst [vmem:[#allocation2 + $0x60] sm:$0xff] %v1572
    %1589 = vst [vmem:[#allocation2 + $0x68] sm:$0xff] %v1573
    %1590 = vst [vmem:[#allocation2 + $0x70] sm:$0xff] %v1574
    %1591 = vst [vmem:[#allocation2 + $0x78] sm:$0xff] %v1575
    // Predicated region
    $region26: #{tpu_custom_call.1} parent=1 // pred_check
      _
    $region27: #{tpu_custom_call.1} parent=1 // pred_check_branch
      %1593 = sbr.rel (0) target = $region29
    $region28: #{tpu_custom_call.1} parent=1 // pred_region
      %s1595 = ssub.s32 2048, 2048
      %1596 = vsyncadd [#allocation3], %s1595
      %s1597 = sshll.u32 [#allocation2], 4
      %s1598 = int_to_ptr.vmem [resolvable:$true] %s1597
      %1603 = dma.vmem_to_hbm [thread:$0]  %s1598, 2048, %s6, [#allocation3], 256, 256, 16
    $region29: #{tpu_custom_call.1} parent=1 // pred_fallthru
      _
    // Predicated region
    $region30: #{tpu_custom_call.1} parent=1 // pred_check
      _
    $region31: #{tpu_custom_call.1} parent=1 // pred_check_branch
      %1605 = sbr.rel (0) target = $region33
    $region32: #{tpu_custom_call.1} parent=1 // pred_region
      %1606 = dma.done [#allocation3], 2048
    $region33: #{tpu_custom_call.1} parent=1 // pred_fallthru
      _
    %1607 = vsyncpa [#allocation3], 1

</llo_original>
